<compile_context>
chip_gen: v7x
topology: tpu7x:2x2x1
jax: 0.10.0
libtpu: 0.0.40
codegen_flags: <defaults>
</compile_context>

<pallas_src>
import math

import jax
import jax.numpy as jnp
from jax.experimental import pallas as pl
from jax.experimental.pallas import tpu as pltpu


def _round_up(a, b):
    return (a + b - 1) // b * b


def gcn_kernel(x_ref, w_ref, adj_ref, b_ref, o_ref, acc_ref):
    k = pl.program_id(1)

    @pl.when(k == 0)
    def _():
        acc_ref[...] = jnp.zeros_like(acc_ref)

    # support tile for this k-slice of nodes: [TK, F_out_pad], f32 MXU accum.
    support = jnp.dot(x_ref[...], w_ref[...],
                      preferred_element_type=jnp.float32)
    # Accumulate adj[i_tile, k_tile] @ support into the resident f32 scratch.
    acc_ref[...] += jnp.dot(adj_ref[...], support.astype(adj_ref.dtype),
                            preferred_element_type=jnp.float32)

    # Epilogue only on the final contraction step: bias add + cast + store
    # (keeps the inner loop a pure MXU accumulate).
    @pl.when(k == pl.num_programs(1) - 1)
    def _():
        o_ref[...] = (acc_ref[...] + b_ref[...]).astype(o_ref.dtype)


def graph_convolution(x, adj, weight, bias=None, *, tm=256, tk=512):
    """Dense GCN layer: adj @ (x @ weight) + bias as a tiled Pallas kernel."""
    n, f_in = x.shape
    f_out = weight.shape[1]
    out_dtype = x.dtype

    # Pad to TPU-friendly shapes: lane-dense (multiples of 128) feature dims,
    # node dim padded to the (tm, tk) tile grid.  Zero padding is exact: padded
    # x rows / adj rows+cols / weight rows+cols contribute nothing.
    n_pad = _round_up(max(n, 1), math.lcm(tm, tk))
    f_in_pad = _round_up(f_in, 128)
    f_out_pad = _round_up(f_out, 128)

    cdt = jnp.bfloat16  # MXU compute dtype; accumulation stays f32
    x_p = jnp.zeros((n_pad, f_in_pad), cdt).at[:n, :f_in].set(x.astype(cdt))
    adj_p = jnp.zeros((n_pad, n_pad), cdt).at[:n, :n].set(adj.astype(cdt))
    w_p = jnp.zeros((f_in_pad, f_out_pad), cdt).at[:f_in, :f_out].set(
        weight.astype(cdt))
    b_p = jnp.zeros((1, f_out_pad), jnp.float32)
    if bias is not None:
        b_p = b_p.at[0, :f_out].set(bias.astype(jnp.float32))

    grid = (n_pad // tm, n_pad // tk)

    out_p = pl.pallas_call(
        gcn_kernel,
        out_shape=jax.ShapeDtypeStruct((n_pad, f_out_pad), out_dtype),
        grid_spec=pltpu.PrefetchScalarGridSpec(
            num_scalar_prefetch=0,
            grid=grid,
            in_specs=[
                # x[k_tile]: node features along the adjacency contraction axis.
                pl.BlockSpec((tk, f_in_pad), lambda i, k: (k, 0)),
                # weight: tiny, resident full-array block.
                pl.BlockSpec((f_in_pad, f_out_pad), lambda i, k: (0, 0)),
                # adj[i_tile, k_tile]: the streamed (dominant-bytes) operand.
                pl.BlockSpec((tm, tk), lambda i, k: (i, k)),
                # bias: tiny, resident full-array block.
                pl.BlockSpec((1, f_out_pad), lambda i, k: (0, 0)),
            ],
            out_specs=pl.BlockSpec((tm, f_out_pad), lambda i, k: (i, 0)),
            scratch_shapes=[pltpu.VMEM((tm, f_out_pad), jnp.float32)],
        ),
        compiler_params=pltpu.CompilerParams(
            dimension_semantics=("parallel", "arbitrary"),
            vmem_limit_bytes=48 * 1024 * 1024,
        ),
    )(x_p, w_p, adj_p, b_p)

    # Slice padding away.
    return out_p[:n, :f_out]


if __name__ == "__main__":
    # Module config: GraphConvolution(in_features=16, out_features=32, bias=True)
    N, F_IN, F_OUT = 8, 16, 32

    key = jax.random.PRNGKey(0)
    k_x, k_adj, k_w, k_b = jax.random.split(key, 4)

    # Deterministic parameter init mirroring reset_parameters():
    # uniform(-stdv, stdv) with stdv = 1/sqrt(out_features)
    stdv = 1.0 / math.sqrt(F_OUT)
    weight = jax.random.uniform(k_w, (F_IN, F_OUT), jnp.float32, -stdv, stdv)
    bias = jax.random.uniform(k_b, (F_OUT,), jnp.float32, -stdv, stdv)

    # Example inputs: node features and a row-normalized dense adjacency.
    x = jax.random.uniform(k_x, (N, F_IN), jnp.float32)
    adj_raw = (jax.random.uniform(k_adj, (N, N), jnp.float32) > 0.5).astype(jnp.float32)
    adj_raw = adj_raw + jnp.eye(N, dtype=jnp.float32)          # self-loops
    adj = adj_raw / jnp.sum(adj_raw, axis=1, keepdims=True)    # row-normalize

    out = graph_convolution(x, adj, weight, bias)
    out = jax.block_until_ready(out)

    # Reference check in plain JAX (same math as the PyTorch forward).
    ref = adj @ (x @ weight) + bias
    assert out.shape == (N, F_OUT)
    # bf16 inputs lose ~3 decimal digits on input quantization; f32 accumulation
    # keeps the end-to-end error well under 1e-2.
    err = float(jnp.max(jnp.abs(out - ref)))
    assert jnp.allclose(out, ref, atol=1e-2, rtol=1e-2), f"max abs err {err}"

    print("KERNEL_OK")
</pallas_src>

<mosaic_0001>
module attributes {stable_mosaic.version = 11 : i64} {
  func.func @gcn_kernel(%arg0: i32, %arg1: i32, %arg2: memref<512x128xbf16, #tpu.memory_space<vmem>>, %arg3: memref<128x128xbf16, #tpu.memory_space<vmem>>, %arg4: memref<256x512xbf16, #tpu.memory_space<vmem>>, %arg5: memref<1x128xf32, #tpu.memory_space<vmem>>, %arg6: memref<256x128xf32, #tpu.memory_space<vmem>>, %arg7: memref<256x128xf32, #tpu.memory_space<vmem>>) attributes {dimension_semantics = [#tpu.dimension_semantics<parallel>, #tpu.dimension_semantics<arbitrary>], iteration_bounds = array<i64: 2, 1>, scalar_prefetch = 0 : i64, scratch_operands = 1 : i64, tpu.core_type = #tpu.core_type<tc>, window_params = [{transform_indices = @transform_0, window_bounds = array<i64: 512, 128>}, {pipeline_mode = #tpu.pipeline_mode<synchronous>, transform_indices = @transform_1, window_bounds = array<i64: 128, 128>}, {transform_indices = @transform_2, window_bounds = array<i64: 256, 512>}, {pipeline_mode = #tpu.pipeline_mode<synchronous>, transform_indices = @transform_3, window_bounds = array<i64: 1, 128>}, {transform_indices = @transform_4, window_bounds = array<i64: 256, 128>}]} {
    %c0_i32 = arith.constant 0 : i32
    %0 = arith.cmpi eq, %arg1, %c0_i32 : i32
    %1 = arith.extui %0 : i1 to i32
    %c0_i32_0 = arith.constant 0 : i32
    %2 = arith.cmpi ne, %1, %c0_i32_0 : i32
    scf.if %2 {
      %cst_13 = arith.constant 0.000000e+00 : f32
      %15 = vector.broadcast %cst_13 : f32 to vector<256x128xf32>
      %c0_14 = arith.constant 0 : index
      %c0_15 = arith.constant 0 : index
      %16 = vector.load %arg7[%c0_14, %c0_15] : memref<256x128xf32, #tpu.memory_space<vmem>>, vector<256x128xf32>
      tpu.vector_store %arg7[%c0_14, %c0_15], %15 {strides = array<i32>} : memref<256x128xf32, #tpu.memory_space<vmem>>, vector<256x128xf32>,
    } else {
    }
    %c0 = arith.constant 0 : index
    %c0_1 = arith.constant 0 : index
    %3 = vector.load %arg2[%c0, %c0_1] : memref<512x128xbf16, #tpu.memory_space<vmem>>, vector<512x128xbf16>
    %c0_2 = arith.constant 0 : index
    %c0_3 = arith.constant 0 : index
    %4 = vector.load %arg3[%c0_2, %c0_3] : memref<128x128xbf16, #tpu.memory_space<vmem>>, vector<128x128xbf16>
    %cst = arith.constant dense<0.000000e+00> : vector<512x128xf32>
    %5 = tpu.matmul %3, %4, %cst {dimension_numbers = #tpu.dot_dimension_numbers<[1], [0], [0], [1], [0, 0, 1, 1], [], []>} : vector<512x128xbf16>, vector<128x128xbf16>, vector<512x128xf32> -> vector<512x128xf32>
    %c0_4 = arith.constant 0 : index
    %c0_5 = arith.constant 0 : index
    %6 = vector.load %arg7[%c0_4, %c0_5] : memref<256x128xf32, #tpu.memory_space<vmem>>, vector<256x128xf32>
    %c0_6 = arith.constant 0 : index
    %c0_7 = arith.constant 0 : index
    %7 = vector.load %arg4[%c0_6, %c0_7] : memref<256x512xbf16, #tpu.memory_space<vmem>>, vector<256x512xbf16>
    %8 = arith.truncf %5 : vector<512x128xf32> to vector<512x128xbf16>
    %cst_8 = arith.constant dense<0.000000e+00> : vector<256x128xf32>
    %9 = tpu.matmul %7, %8, %cst_8 {dimension_numbers = #tpu.dot_dimension_numbers<[1], [0], [0], [1], [0, 0, 1, 1], [], []>} : vector<256x512xbf16>, vector<512x128xbf16>, vector<256x128xf32> -> vector<256x128xf32>
    %10 = arith.addf %6, %9 : vector<256x128xf32>
    %c0_9 = arith.constant 0 : index
    %c0_10 = arith.constant 0 : index
    %11 = vector.load %arg7[%c0_9, %c0_10] : memref<256x128xf32, #tpu.memory_space<vmem>>, vector<256x128xf32>
    tpu.vector_store %arg7[%c0_9, %c0_10], %10 {strides = array<i32>} : memref<256x128xf32, #tpu.memory_space<vmem>>, vector<256x128xf32>,
    %c0_i32_11 = arith.constant 0 : i32
    %12 = arith.cmpi eq, %arg1, %c0_i32_11 : i32
    %13 = arith.extui %12 : i1 to i32
    %c0_i32_12 = arith.constant 0 : i32
    %14 = arith.cmpi ne, %13, %c0_i32_12 : i32
    scf.if %14 {
      %c0_13 = arith.constant 0 : index
      %c0_14 = arith.constant 0 : index
      %15 = vector.load %arg7[%c0_13, %c0_14] : memref<256x128xf32, #tpu.memory_space<vmem>>, vector<256x128xf32>
      %c0_15 = arith.constant 0 : index
      %c0_16 = arith.constant 0 : index
      %16 = vector.load %arg5[%c0_15, %c0_16] : memref<1x128xf32, #tpu.memory_space<vmem>>, vector<1x128xf32>
      %17 = vector.broadcast %16 : vector<1x128xf32> to vector<256x128xf32>
      %18 = arith.addf %15, %17 : vector<256x128xf32>
      %c0_17 = arith.constant 0 : index
      %c0_18 = arith.constant 0 : index
      %19 = vector.load %arg6[%c0_17, %c0_18] : memref<256x128xf32, #tpu.memory_space<vmem>>, vector<256x128xf32>
      tpu.vector_store %arg6[%c0_17, %c0_18], %18 {strides = array<i32>} : memref<256x128xf32, #tpu.memory_space<vmem>>, vector<256x128xf32>,
    } else {
    }
    return
  }
  func.func @transform_0(%arg0: i32, %arg1: i32) -> (i32, i32) {
    %c0_i32 = arith.constant 0 : i32
    %c0_i32_0 = arith.constant 0 : i32
    return %arg1, %c0_i32 : i32, i32
  }
  func.func @transform_1(%arg0: i32, %arg1: i32) -> (i32, i32) {
    %c0_i32 = arith.constant 0 : i32
    %c0_i32_0 = arith.constant 0 : i32
    %c0_i32_1 = arith.constant 0 : i32
    return %c0_i32, %c0_i32_0 : i32, i32
  }
  func.func @transform_2(%arg0: i32, %arg1: i32) -> (i32, i32) {
    %c0_i32 = arith.constant 0 : i32
    return %arg0, %arg1 : i32, i32
  }
  func.func @transform_3(%arg0: i32, %arg1: i32) -> (i32, i32) {
    %c0_i32 = arith.constant 0 : i32
    %c0_i32_0 = arith.constant 0 : i32
    %c0_i32_1 = arith.constant 0 : i32
    return %c0_i32, %c0_i32_0 : i32, i32
  }
  func.func @transform_4(%arg0: i32, %arg1: i32) -> (i32, i32) {
    %c0_i32 = arith.constant 0 : i32
    %c0_i32_0 = arith.constant 0 : i32
    return %arg0, %c0_i32 : i32, i32
  }
}

</mosaic_0001>

<llo_original>
// kernel: tpu_custom_call.1
$region0: #{tpu_custom_call.1}
  #allocation0 [shape = 'u32[]', space=smem, size = 0x4, offset = 0x4, fixed_abs, tag = 'smem constant byte address 0x4 - core index']
  #allocation1 [shape = 'u32[144,128]{1,0:T(1,128)}', space=vmem, size = 0x12000, scoped, tag = 'internal scratch']
  #allocation2 [shape = 'f32[256,128]{1,0:T(8,128)}', space=vmem, size = 0x20000, scoped, tag = 'scratch operand']
  %s0 = inlined_call_operand.hbm [shape: bf16[512,128], index: 0, kind: input, shape index: {}]
  %s1 = inlined_call_operand.hbm [shape: bf16[128,128], index: 1, kind: input, shape index: {}]
  %s2 = inlined_call_operand.hbm [shape: bf16[512,512], index: 2, kind: input, shape index: {}]
  %s3 = inlined_call_operand.vmem [shape: f32[1,128], index: 3, kind: input, shape index: {}]
  %s4 = inlined_call_operand.hbm [shape: f32[512,128], index: 4, kind: output, shape index: {}]
  %s5 = sld [smem:[#allocation0]]
  $region69: #{tpu_custom_call.1} parent=0
    _
  %s7 = ssub.s32 1, %s5
  %s8 = scalar_select 0, %s7, %s5
  $region1: #{tpu_custom_call.1} parent=0
    #allocation3 [shape = 'u8[131072]{0}', space=vmem, size = 0x20000, scoped, tag = 'input window, operand 0, single buffered']
    #allocation4 [shape = 's32[2]{0}', space=sflag, size = 0x8, scoped, tag = 'scoped memory for tpu_custom_call.1']
    #allocation5 [shape = 's32[2]{0}', space=sflag, size = 0x8, scoped, tag = 'scoped memory for tpu_custom_call.1']
    #allocation6 [shape = 'u8[32768]{0}', space=vmem, size = 0x8000, scoped, tag = 'input window, operand 1, single buffered']
    #allocation7 [shape = 's32[1]{0}', space=sflag, size = 0x4, scoped, tag = 'scoped memory for tpu_custom_call.1']
    #allocation8 [shape = 'u8[524288]{0}', space=vmem, size = 0x80000, scoped, tag = 'input window, operand 2']
    #allocation9 [shape = 'u8[262144]{0}', space=vmem, size = 0x40000, scoped, tag = 'output window, operand 0']
    %9 = vsyncpa [#allocation4], 0
    %10 = vsyncpa [#allocation7], 0
    %11 = vsyncpa [#allocation5], 0
    %s12 = scalar_lea.sflag [#allocation5], 1
    %13 = vsyncpa %s12, 0
    loop: start=0, step=1, limit=4
    $region2: #{tpu_custom_call.1} parent=1 // loop_pre_header
      _
    $region3: #{tpu_custom_call.1} parent=1 // loop_header
      %s15 = sphi 0, %s19
      %p16 = scmp.ge.s32.totalorder %s15, 4
      %s22 = sphi 0, %s34
      %s23 = sphi 0, %s30
      %s24 = sphi 0, %s22
      %s25 = sphi 0, %s23
      %s26 = sphi 0, %s24
      %s27 = sphi 0, %s25
      %s37 = sphi 0, %s39
      %s40 = sphi 0, %s37
      %s41 = sphi 0, %s40
      %s57 = sphi 0, %s41
      %s61 = sphi 0, %s61
      %s63 = sphi 0, %s61
      %s64 = sphi 0, %s63
      %s78 = sphi 0, %s64
      %s86 = sphi 0, %s88
      %s89 = sphi 0, %s86
      %s90 = sphi 0, %s89
      %s106 = sphi 0, %s90
      %s110 = sphi 0, %s110
      %s112 = sphi 0, %s110
      %s113 = sphi 0, %s112
      %s127 = sphi 0, %s113
      %s133 = sphi 0, %s135
      %s136 = sphi 0, %s133
      %s137 = sphi 0, %s136
      %s153 = sphi 0, %s137
    $region4: #{tpu_custom_call.1} parent=1 // loop_header_branch
      %18 = sbr.rel (%p16) target = $region8
    $region5: #{tpu_custom_call.1} parent=1 // loop_body
      %s20 = ssub.s32 %s15, 1
      %s21 = ssub.s32 %s15, 2
      %s28 = sadd.s32 1, %s23
      %p29 = scmp.ge.s32.totalorder %s28, 1
      %s30 = scalar_select %p29, 0, %s28
      %s31 = sadd.s32 1, %s22
      %s32 = scalar_select %p29, %s31, %s22
      %p33 = scmp.ge.s32.totalorder %s32, 2
      %s34 = scalar_select %p33, 0, %s32
      %s35 = ssub.s32 %s23, %s30
      %p36 = scmp.eq.s32.totalorder %s35, 0
      %s38 = sadd.s32 %s37, 1
      %s39 = scalar_select %p36, %s37, %s38
      %p42 = pneg %p36
      %p43 = scmp.eq.s32.totalorder %s15, 1
      %p44 = por %p42, %p43
      %p45 = scmp.ne.s32.totalorder %s37, %s40
      %p46 = scmp.eq.s32.totalorder %s15, 0
      %p47 = por %p45, %p46
      %p48 = scmp.ne.s32.totalorder %s37, %s40
      %p49 = scmp.eq.s32.totalorder %s20, 1
      %p50 = por %p48, %p49
      %p51 = scmp.ne.s32.totalorder %s40, %s41
      %p52 = scmp.eq.s32.totalorder %s20, 0
      %p53 = por %p51, %p52
      %p54 = scmp.ne.s32.totalorder %s40, %s41
      %p55 = scmp.eq.s32.totalorder %s21, 1
      %p56 = por %p54, %p55
      %p58 = scmp.ne.s32.totalorder %s41, %s57
      %p59 = scmp.eq.s32.totalorder %s21, 0
      %p60 = por %p58, %p59
      %s62 = sadd.s32 %s61, 1
      %p65 = scmp.eq.s32.totalorder %s15, 1
      %p66 = scmp.ne.s32.totalorder %s61, %s63
      %p67 = scmp.eq.s32.totalorder %s15, 0
      %p68 = por %p66, %p67
      %p69 = scmp.ne.s32.totalorder %s61, %s63
      %p70 = scmp.eq.s32.totalorder %s20, 1
      %p71 = por %p69, %p70
      %p72 = scmp.ne.s32.totalorder %s63, %s64
      %p73 = scmp.eq.s32.totalorder %s20, 0
      %p74 = por %p72, %p73
      %p75 = scmp.ne.s32.totalorder %s63, %s64
      %p76 = scmp.eq.s32.totalorder %s21, 1
      %p77 = por %p75, %p76
      %p79 = scmp.ne.s32.totalorder %s64, %s78
      %p80 = scmp.eq.s32.totalorder %s21, 0
      %p81 = por %p79, %p80
      %s82 = ssub.s32 %s22, %s34
      %s83 = ssub.s32 %s23, %s30
      %s84 = sor.u32 %s82, %s83
      %p85 = scmp.eq.s32.totalorder %s84, 0
      %s87 = sadd.s32 %s86, 1
      %s88 = scalar_select %p85, %s86, %s87
      %p91 = pneg %p85
      %p92 = scmp.eq.s32.totalorder %s15, 1
      %p93 = por %p91, %p92
      %p94 = scmp.ne.s32.totalorder %s86, %s89
      %p95 = scmp.eq.s32.totalorder %s15, 0
      %p96 = por %p94, %p95
      %p97 = scmp.ne.s32.totalorder %s86, %s89
      %p98 = scmp.eq.s32.totalorder %s20, 1
      %p99 = por %p97, %p98
      %p100 = scmp.ne.s32.totalorder %s89, %s90
      %p101 = scmp.eq.s32.totalorder %s20, 0
      %p102 = por %p100, %p101
      %p103 = scmp.ne.s32.totalorder %s89, %s90
      %p104 = scmp.eq.s32.totalorder %s21, 1
      %p105 = por %p103, %p104
      %p107 = scmp.ne.s32.totalorder %s90, %s106
      %p108 = scmp.eq.s32.totalorder %s21, 0
      %p109 = por %p107, %p108
      %s111 = sadd.s32 %s110, 1
      %p114 = scmp.eq.s32.totalorder %s15, 1
      %p115 = scmp.ne.s32.totalorder %s110, %s112
      %p116 = scmp.eq.s32.totalorder %s15, 0
      %p117 = por %p115, %p116
      %p118 = scmp.ne.s32.totalorder %s110, %s112
      %p119 = scmp.eq.s32.totalorder %s20, 1
      %p120 = por %p118, %p119
      %p121 = scmp.ne.s32.totalorder %s112, %s113
      %p122 = scmp.eq.s32.totalorder %s20, 0
      %p123 = por %p121, %p122
      %p124 = scmp.ne.s32.totalorder %s112, %s113
      %p125 = scmp.eq.s32.totalorder %s21, 1
      %p126 = por %p124, %p125
      %p128 = scmp.ne.s32.totalorder %s113, %s127
      %p129 = scmp.eq.s32.totalorder %s21, 0
      %p130 = por %p128, %p129
      %s131 = ssub.s32 %s22, %s34
      %p132 = scmp.eq.s32.totalorder %s131, 0
      %s134 = sadd.s32 %s133, 1
      %s135 = scalar_select %p132, %s133, %s134
      %p138 = pneg %p132
      %p139 = scmp.eq.s32.totalorder %s15, 1
      %p140 = por %p138, %p139
      %p141 = scmp.ne.s32.totalorder %s133, %s136
      %p142 = scmp.eq.s32.totalorder %s15, 0
      %p143 = por %p141, %p142
      %p144 = scmp.ne.s32.totalorder %s133, %s136
      %p145 = scmp.eq.s32.totalorder %s20, 1
      %p146 = por %p144, %p145
      %p147 = scmp.ne.s32.totalorder %s136, %s137
      %p148 = scmp.eq.s32.totalorder %s20, 0
      %p149 = por %p147, %p148
      %p150 = scmp.ne.s32.totalorder %s136, %s137
      %p151 = scmp.eq.s32.totalorder %s21, 1
      %p152 = por %p150, %p151
      %p154 = scmp.ne.s32.totalorder %s137, %s153
      %p155 = scmp.eq.s32.totalorder %s21, 0
      %p156 = por %p154, %p155
      %p157 = scmp.le.s32.totalorder 1, %s15
      %p158 = scmp.lt.s32.totalorder %s15, 3
      %p159 = pnand %p157, %p158
      %p160 = pneg %p159
      // Predicated region
      $region9: #{tpu_custom_call.1} parent=5 // pred_check
        _
      $region10: #{tpu_custom_call.1} parent=5 // pred_check_branch
        %162 = sbr.rel (%p159) target = $region12
      $region11: #{tpu_custom_call.1} parent=5 // pred_region
        %s163 = ssub.s32 %s15, 1
        // Predicated region
        $region13: #{tpu_custom_call.1} parent=11 // pred_check
          %p164 = pneg %p53
        $region14: #{tpu_custom_call.1} parent=11 // pred_check_branch
          %166 = sbr.rel (%p164) target = $region16
        $region15: #{tpu_custom_call.1} parent=11 // pred_region
          %s167 = smul.u32 64, %s25
          %s169 = ssub.s32 4096, 4096
          %170 = vsyncadd [#allocation4], %s169
          %s171 = smul.addr %s167, 64
          %s172 = scalar_lea.hbm %s0, %s171
          %s173 = sshll.u32 [#allocation3], 4
          %s174 = int_to_ptr.vmem [resolvable:$true] %s173
          %179 = dma.hbm_to_vmem [thread:$0]  %s172, 4096, %s174, [#allocation4], 64, 64, 4
        $region16: #{tpu_custom_call.1} parent=11 // pred_fallthru
          _
        // Predicated region
        $region17: #{tpu_custom_call.1} parent=11 // pred_check
          %p180 = pneg %p74
        $region18: #{tpu_custom_call.1} parent=11 // pred_check_branch
          %182 = sbr.rel (%p180) target = $region20
        $region19: #{tpu_custom_call.1} parent=11 // pred_region
          %s184 = ssub.s32 1024, 1024
          %185 = vsyncadd [#allocation7], %s184
          %s186 = sshll.u32 [#allocation6], 4
          %s187 = int_to_ptr.vmem [resolvable:$true] %s186
          %192 = dma.hbm_to_vmem [thread:$0]  %s1, 1024, %s187, [#allocation7], 64, 64, 4
        $region20: #{tpu_custom_call.1} parent=11 // pred_fallthru
          _
        // Predicated region
        $region21: #{tpu_custom_call.1} parent=11 // pred_check
          %p193 = pneg %p123
        $region22: #{tpu_custom_call.1} parent=11 // pred_check_branch
          %195 = sbr.rel (%p193) target = $region24
        $region23: #{tpu_custom_call.1} parent=11 // pred_region
          _
        $region24: #{tpu_custom_call.1} parent=11 // pred_fallthru
          _
      $region12: #{tpu_custom_call.1} parent=5 // pred_fallthru
        _
      %p196 = scmp.lt.s32.totalorder %s15, 2
      // Predicated region
      $region25: #{tpu_custom_call.1} parent=5 // pred_check
        %p197 = pneg %p196
      $region26: #{tpu_custom_call.1} parent=5 // pred_check_branch
        %199 = sbr.rel (%p197) target = $region28
      $region27: #{tpu_custom_call.1} parent=5 // pred_region
        // Predicated region
        $region29: #{tpu_custom_call.1} parent=27 // pred_check
          %p200 = pneg %p96
        $region30: #{tpu_custom_call.1} parent=27 // pred_check_branch
          %202 = sbr.rel (%p200) target = $region32
        $region31: #{tpu_custom_call.1} parent=27 // pred_region
          %s203 = sand.u32 %s15, 1
          %s204 = scalar_lea.sflag [#allocation4], %s203
          %s205 = sand.u32 %s86, 1
          %s206 = smul.addr %s205, 512
          %s207 = scalar_lea.vmem [#allocation8], %s206
          %s208 = smul.u32 32, %s22
          %s209 = smul.u32 4, %s23
          %s211 = ssub.s32 8192, 8192
          %212 = vsyncadd %s204, %s211
          %s213 = smul.addr %s208, 4
          %s214 = sadd.s32 %s209, %s213
          %s215 = smul.addr %s214, 64
          %s216 = scalar_lea.hbm %s2, %s215
          %s217 = sshll.u32 %s207, 4
          %s218 = int_to_ptr.vmem [resolvable:$true] %s217
          %223 = dma.hbm_to_vmem [thread:$0]  %s216, 8192, %s218, %s204, 256, 256, 16
        $region32: #{tpu_custom_call.1} parent=27 // pred_fallthru
          _
      $region28: #{tpu_custom_call.1} parent=5 // pred_fallthru
        _
      %p224 = scmp.le.s32.totalorder 1, %s15
      %p225 = scmp.lt.s32.totalorder %s15, 3
      %p226 = pnand %p224, %p225
      %p227 = pneg %p226
      // Predicated region
      $region33: #{tpu_custom_call.1} parent=5 // pred_check
        _
      $region34: #{tpu_custom_call.1} parent=5 // pred_check_branch
        %229 = sbr.rel (%p226) target = $region36
      $region35: #{tpu_custom_call.1} parent=5 // pred_region
        %s230 = ssub.s32 %s15, 1
        // Predicated region
        $region37: #{tpu_custom_call.1} parent=35 // pred_check
          %p231 = pneg %p53
        $region38: #{tpu_custom_call.1} parent=35 // pred_check_branch
          %233 = sbr.rel (%p231) target = $region40
        $region39: #{tpu_custom_call.1} parent=35 // pred_region
          %234 = dma.done [#allocation4], 4096
        $region40: #{tpu_custom_call.1} parent=35 // pred_fallthru
          _
        // Predicated region
        $region41: #{tpu_custom_call.1} parent=35 // pred_check
          %p235 = pneg %p74
        $region42: #{tpu_custom_call.1} parent=35 // pred_check_branch
          %237 = sbr.rel (%p235) target = $region44
        $region43: #{tpu_custom_call.1} parent=35 // pred_region
          %238 = dma.done [#allocation7], 1024
        $region44: #{tpu_custom_call.1} parent=35 // pred_fallthru
          _
        %s239 = sand.u32 %s20, 1
        %s240 = scalar_lea.sflag [#allocation4], %s239
        %s241 = sand.u32 %s89, 1
        %s242 = smul.addr %s241, 512
        %s243 = scalar_lea.vmem [#allocation8], %s242
        // Predicated region
        $region45: #{tpu_custom_call.1} parent=35 // pred_check
          %p244 = pneg %p102
        $region46: #{tpu_custom_call.1} parent=35 // pred_check_branch
          %246 = sbr.rel (%p244) target = $region48
        $region47: #{tpu_custom_call.1} parent=35 // pred_region
          %247 = dma.done %s240, 8192
        $region48: #{tpu_custom_call.1} parent=35 // pred_fallthru
          _
        %p248 = pneg %p53
        %p249 = pneg %p50
        %p250 = pneg %p74
        %p251 = pneg %p71
        %s252 = sand.u32 %s20, 1
        %s253 = scalar_lea.sflag [#allocation4], %s252
        %s254 = sand.u32 %s89, 1
        %s255 = smul.addr %s254, 512
        %s256 = scalar_lea.vmem [#allocation8], %s255
        %p257 = pneg %p102
        %p258 = pneg %p99
        %p259 = pneg %p123
        %p260 = pneg %p120
        %p261 = pneg %p149
        %p262 = pneg %p146
        %s263 = sand.u32 %s136, 1
        %s264 = scalar_lea.sflag [#allocation5], %s263
        %s265 = sand.u32 %s136, 1
        %s266 = smul.addr %s265, 256
        %s267 = scalar_lea.vmem [#allocation9], %s266
        %s268 = smul.u32 64, %s25
        %s269 = smul.u32 32, %s24
        %s270 = smul.u32 4, %s25
        %s271 = smul.u32 32, %s24
        %p273 = scmp.eq.s32.totalorder %s25, 0
        // Predicated region
        $region49: #{tpu_custom_call.1} parent=35 // pred_check
          %p274 = pneg %p273
        $region50: #{tpu_custom_call.1} parent=35 // pred_check_branch
          %276 = sbr.rel (%p274) target = $region52
        $region51: #{tpu_custom_call.1} parent=35 // pred_region
          %277 = vst [vmem:[#allocation2] sm:$0xff] 0.0
          %278 = vst [vmem:[#allocation2 + $0x8] sm:$0xff] 0.0
          %279 = vst [vmem:[#allocation2 + $0x10] sm:$0xff] 0.0
          %280 = vst [vmem:[#allocation2 + $0x18] sm:$0xff] 0.0
          %281 = vst [vmem:[#allocation2 + $0x20] sm:$0xff] 0.0
          %282 = vst [vmem:[#allocation2 + $0x28] sm:$0xff] 0.0
          %283 = vst [vmem:[#allocation2 + $0x30] sm:$0xff] 0.0
          %284 = vst [vmem:[#allocation2 + $0x38] sm:$0xff] 0.0
          %285 = vst [vmem:[#allocation2 + $0x40] sm:$0xff] 0.0
          %286 = vst [vmem:[#allocation2 + $0x48] sm:$0xff] 0.0
          %287 = vst [vmem:[#allocation2 + $0x50] sm:$0xff] 0.0
          %288 = vst [vmem:[#allocation2 + $0x58] sm:$0xff] 0.0
          %289 = vst [vmem:[#allocation2 + $0x60] sm:$0xff] 0.0
          %290 = vst [vmem:[#allocation2 + $0x68] sm:$0xff] 0.0
          %291 = vst [vmem:[#allocation2 + $0x70] sm:$0xff] 0.0
          %292 = vst [vmem:[#allocation2 + $0x78] sm:$0xff] 0.0
          %293 = vst [vmem:[#allocation2 + $0x80] sm:$0xff] 0.0
          %294 = vst [vmem:[#allocation2 + $0x88] sm:$0xff] 0.0
          %295 = vst [vmem:[#allocation2 + $0x90] sm:$0xff] 0.0
          %296 = vst [vmem:[#allocation2 + $0x98] sm:$0xff] 0.0
          %297 = vst [vmem:[#allocation2 + $0xa0] sm:$0xff] 0.0
          %298 = vst [vmem:[#allocation2 + $0xa8] sm:$0xff] 0.0
          %299 = vst [vmem:[#allocation2 + $0xb0] sm:$0xff] 0.0
          %300 = vst [vmem:[#allocation2 + $0xb8] sm:$0xff] 0.0
          %301 = vst [vmem:[#allocation2 + $0xc0] sm:$0xff] 0.0
          %302 = vst [vmem:[#allocation2 + $0xc8] sm:$0xff] 0.0
          %303 = vst [vmem:[#allocation2 + $0xd0] sm:$0xff] 0.0
          %304 = vst [vmem:[#allocation2 + $0xd8] sm:$0xff] 0.0
          %305 = vst [vmem:[#allocation2 + $0xe0] sm:$0xff] 0.0
          %306 = vst [vmem:[#allocation2 + $0xe8] sm:$0xff] 0.0
          %307 = vst [vmem:[#allocation2 + $0xf0] sm:$0xff] 0.0
          %308 = vst [vmem:[#allocation2 + $0xf8] sm:$0xff] 0.0
        $region52: #{tpu_custom_call.1} parent=35 // pred_fallthru
          _
        %v309 = vld [vmem:[#allocation3] sm:$0xf]
        %v310 = vld [vmem:[#allocation3 + $0x4] sm:$0xf]
        %v311 = vld [vmem:[#allocation3 + $0x8] sm:$0xf]
        %v312 = vld [vmem:[#allocation3 + $0xc] sm:$0xf]
        %v313 = vld [vmem:[#allocation3 + $0x10] sm:$0xf]
        %v314 = vld [vmem:[#allocation3 + $0x14] sm:$0xf]
        %v315 = vld [vmem:[#allocation3 + $0x18] sm:$0xf]
        %v316 = vld [vmem:[#allocation3 + $0x1c] sm:$0xf]
        %v317 = vld [vmem:[#allocation3 + $0x20] sm:$0xf]
        %v318 = vld [vmem:[#allocation3 + $0x24] sm:$0xf]
        %v319 = vld [vmem:[#allocation3 + $0x28] sm:$0xf]
        %v320 = vld [vmem:[#allocation3 + $0x2c] sm:$0xf]
        %v321 = vld [vmem:[#allocation3 + $0x30] sm:$0xf]
        %v322 = vld [vmem:[#allocation3 + $0x34] sm:$0xf]
        %v323 = vld [vmem:[#allocation3 + $0x38] sm:$0xf]
        %v324 = vld [vmem:[#allocation3 + $0x3c] sm:$0xf]
        %v325 = vld [vmem:[#allocation3 + $0x40] sm:$0xf]
        %v326 = vld [vmem:[#allocation3 + $0x44] sm:$0xf]
        %v327 = vld [vmem:[#allocation3 + $0x48] sm:$0xf]
        %v328 = vld [vmem:[#allocation3 + $0x4c] sm:$0xf]
        %v329 = vld [vmem:[#allocation3 + $0x50] sm:$0xf]
        %v330 = vld [vmem:[#allocation3 + $0x54] sm:$0xf]
        %v331 = vld [vmem:[#allocation3 + $0x58] sm:$0xf]
        %v332 = vld [vmem:[#allocation3 + $0x5c] sm:$0xf]
        %v333 = vld [vmem:[#allocation3 + $0x60] sm:$0xf]
        %v334 = vld [vmem:[#allocation3 + $0x64] sm:$0xf]
        %v335 = vld [vmem:[#allocation3 + $0x68] sm:$0xf]
        %v336 = vld [vmem:[#allocation3 + $0x6c] sm:$0xf]
        %v337 = vld [vmem:[#allocation3 + $0x70] sm:$0xf]
        %v338 = vld [vmem:[#allocation3 + $0x74] sm:$0xf]
        %v339 = vld [vmem:[#allocation3 + $0x78] sm:$0xf]
        %v340 = vld [vmem:[#allocation3 + $0x7c] sm:$0xf]
        %v341 = vld [vmem:[#allocation3 + $0x80] sm:$0xf]
        %v342 = vld [vmem:[#allocation3 + $0x84] sm:$0xf]
        %v343 = vld [vmem:[#allocation3 + $0x88] sm:$0xf]
        %v344 = vld [vmem:[#allocation3 + $0x8c] sm:$0xf]
        %v345 = vld [vmem:[#allocation3 + $0x90] sm:$0xf]
        %v346 = vld [vmem:[#allocation3 + $0x94] sm:$0xf]
        %v347 = vld [vmem:[#allocation3 + $0x98] sm:$0xf]
        %v348 = vld [vmem:[#allocation3 + $0x9c] sm:$0xf]
        %v349 = vld [vmem:[#allocation3 + $0xa0] sm:$0xf]
        %v350 = vld [vmem:[#allocation3 + $0xa4] sm:$0xf]
        %v351 = vld [vmem:[#allocation3 + $0xa8] sm:$0xf]
        %v352 = vld [vmem:[#allocation3 + $0xac] sm:$0xf]
        %v353 = vld [vmem:[#allocation3 + $0xb0] sm:$0xf]
        %v354 = vld [vmem:[#allocation3 + $0xb4] sm:$0xf]
        %v355 = vld [vmem:[#allocation3 + $0xb8] sm:$0xf]
        %v356 = vld [vmem:[#allocation3 + $0xbc] sm:$0xf]
        %v357 = vld [vmem:[#allocation3 + $0xc0] sm:$0xf]
        %v358 = vld [vmem:[#allocation3 + $0xc4] sm:$0xf]
        %v359 = vld [vmem:[#allocation3 + $0xc8] sm:$0xf]
        %v360 = vld [vmem:[#allocation3 + $0xcc] sm:$0xf]
        %v361 = vld [vmem:[#allocation3 + $0xd0] sm:$0xf]
        %v362 = vld [vmem:[#allocation3 + $0xd4] sm:$0xf]
        %v363 = vld [vmem:[#allocation3 + $0xd8] sm:$0xf]
        %v364 = vld [vmem:[#allocation3 + $0xdc] sm:$0xf]
        %v365 = vld [vmem:[#allocation3 + $0xe0] sm:$0xf]
        %v366 = vld [vmem:[#allocation3 + $0xe4] sm:$0xf]
        %v367 = vld [vmem:[#allocation3 + $0xe8] sm:$0xf]
        %v368 = vld [vmem:[#allocation3 + $0xec] sm:$0xf]
        %v369 = vld [vmem:[#allocation3 + $0xf0] sm:$0xf]
        %v370 = vld [vmem:[#allocation3 + $0xf4] sm:$0xf]
        %v371 = vld [vmem:[#allocation3 + $0xf8] sm:$0xf]
        %v372 = vld [vmem:[#allocation3 + $0xfc] sm:$0xf]
        %v373 = vld [vmem:[#allocation6] sm:$0xf]
        %v374 = vld [vmem:[#allocation6 + $0x4] sm:$0xf]
        %v375 = vld [vmem:[#allocation6 + $0x8] sm:$0xf]
        %v376 = vld [vmem:[#allocation6 + $0xc] sm:$0xf]
        %v377 = vld [vmem:[#allocation6 + $0x10] sm:$0xf]
        %v378 = vld [vmem:[#allocation6 + $0x14] sm:$0xf]
        %v379 = vld [vmem:[#allocation6 + $0x18] sm:$0xf]
        %v380 = vld [vmem:[#allocation6 + $0x1c] sm:$0xf]
        %v381 = vld [vmem:[#allocation6 + $0x20] sm:$0xf]
        %v382 = vld [vmem:[#allocation6 + $0x24] sm:$0xf]
        %v383 = vld [vmem:[#allocation6 + $0x28] sm:$0xf]
        %v384 = vld [vmem:[#allocation6 + $0x2c] sm:$0xf]
        %v385 = vld [vmem:[#allocation6 + $0x30] sm:$0xf]
        %v386 = vld [vmem:[#allocation6 + $0x34] sm:$0xf]
        %v387 = vld [vmem:[#allocation6 + $0x38] sm:$0xf]
        %v388 = vld [vmem:[#allocation6 + $0x3c] sm:$0xf]
        %v453 = vunpack.c.l.b16 %v309
        %v454 = vunpack.c.l.b16 %v310
        %v455 = vunpack.c.l.b16 %v311
        %v456 = vunpack.c.l.b16 %v312
        %v457 = vunpack.c.l.b16 %v313
        %v458 = vunpack.c.l.b16 %v314
        %v459 = vunpack.c.l.b16 %v315
        %v460 = vunpack.c.l.b16 %v316
        %v461 = vunpack.c.l.b16 %v317
        %v462 = vunpack.c.l.b16 %v318
        %v463 = vunpack.c.l.b16 %v319
        %v464 = vunpack.c.l.b16 %v320
        %v465 = vunpack.c.l.b16 %v321
        %v466 = vunpack.c.l.b16 %v322
        %v467 = vunpack.c.l.b16 %v323
        %v468 = vunpack.c.l.b16 %v324
        %v469 = vunpack.c.l.b16 %v325
        %v470 = vunpack.c.l.b16 %v326
        %v471 = vunpack.c.l.b16 %v327
        %v472 = vunpack.c.l.b16 %v328
        %v473 = vunpack.c.l.b16 %v329
        %v474 = vunpack.c.l.b16 %v330
        %v475 = vunpack.c.l.b16 %v331
        %v476 = vunpack.c.l.b16 %v332
        %v477 = vunpack.c.l.b16 %v333
        %v478 = vunpack.c.l.b16 %v334
        %v479 = vunpack.c.l.b16 %v335
        %v480 = vunpack.c.l.b16 %v336
        %v481 = vunpack.c.l.b16 %v337
        %v482 = vunpack.c.l.b16 %v338
        %v483 = vunpack.c.l.b16 %v339
        %v484 = vunpack.c.l.b16 %v340
        %v485 = vunpack.c.l.b16 %v341
        %v486 = vunpack.c.l.b16 %v342
        %v487 = vunpack.c.l.b16 %v343
        %v488 = vunpack.c.l.b16 %v344
        %v489 = vunpack.c.l.b16 %v345
        %v490 = vunpack.c.l.b16 %v346
        %v491 = vunpack.c.l.b16 %v347
        %v492 = vunpack.c.l.b16 %v348
        %v493 = vunpack.c.l.b16 %v349
        %v494 = vunpack.c.l.b16 %v350
        %v495 = vunpack.c.l.b16 %v351
        %v496 = vunpack.c.l.b16 %v352
        %v497 = vunpack.c.l.b16 %v353
        %v498 = vunpack.c.l.b16 %v354
        %v499 = vunpack.c.l.b16 %v355
        %v500 = vunpack.c.l.b16 %v356
        %v501 = vunpack.c.l.b16 %v357
        %v502 = vunpack.c.l.b16 %v358
        %v503 = vunpack.c.l.b16 %v359
        %v504 = vunpack.c.l.b16 %v360
        %v505 = vunpack.c.l.b16 %v361
        %v506 = vunpack.c.l.b16 %v362
        %v507 = vunpack.c.l.b16 %v363
        %v508 = vunpack.c.l.b16 %v364
        %v509 = vunpack.c.l.b16 %v365
        %v510 = vunpack.c.l.b16 %v366
        %v511 = vunpack.c.l.b16 %v367
        %v512 = vunpack.c.l.b16 %v368
        %v513 = vunpack.c.l.b16 %v369
        %v514 = vunpack.c.l.b16 %v370
        %v515 = vunpack.c.l.b16 %v371
        %v516 = vunpack.c.l.b16 %v372
        %v517 = vpack.c.b16 %v454, %v453
        %v518 = vpack.c.b16 %v456, %v455
        %v519 = vpack.c.b16 %v458, %v457
        %v520 = vpack.c.b16 %v460, %v459
        %v521 = vpack.c.b16 %v462, %v461
        %v522 = vpack.c.b16 %v464, %v463
        %v523 = vpack.c.b16 %v466, %v465
        %v524 = vpack.c.b16 %v468, %v467
        %v525 = vpack.c.b16 %v470, %v469
        %v526 = vpack.c.b16 %v472, %v471
        %v527 = vpack.c.b16 %v474, %v473
        %v528 = vpack.c.b16 %v476, %v475
        %v529 = vpack.c.b16 %v478, %v477
        %v530 = vpack.c.b16 %v480, %v479
        %v531 = vpack.c.b16 %v482, %v481
        %v532 = vpack.c.b16 %v484, %v483
        %v533 = vpack.c.b16 %v486, %v485
        %v534 = vpack.c.b16 %v488, %v487
        %v535 = vpack.c.b16 %v490, %v489
        %v536 = vpack.c.b16 %v492, %v491
        %v537 = vpack.c.b16 %v494, %v493
        %v538 = vpack.c.b16 %v496, %v495
        %v539 = vpack.c.b16 %v498, %v497
        %v540 = vpack.c.b16 %v500, %v499
        %v541 = vpack.c.b16 %v502, %v501
        %v542 = vpack.c.b16 %v504, %v503
        %v543 = vpack.c.b16 %v506, %v505
        %v544 = vpack.c.b16 %v508, %v507
        %v545 = vpack.c.b16 %v510, %v509
        %v546 = vpack.c.b16 %v512, %v511
        %v547 = vpack.c.b16 %v514, %v513
        %v548 = vpack.c.b16 %v516, %v515
        %v597 = vunpack.c.l.b16 %v373
        %v598 = vunpack.c.l.b16 %v374
        %v599 = vunpack.c.l.b16 %v375
        %v600 = vunpack.c.l.b16 %v376
        %v601 = vunpack.c.l.b16 %v377
        %v602 = vunpack.c.l.b16 %v378
        %v603 = vunpack.c.l.b16 %v379
        %v604 = vunpack.c.l.b16 %v380
        %v605 = vunpack.c.l.b16 %v381
        %v606 = vunpack.c.l.b16 %v382
        %v607 = vunpack.c.l.b16 %v383
        %v608 = vunpack.c.l.b16 %v384
        %v609 = vunpack.c.l.b16 %v385
        %v610 = vunpack.c.l.b16 %v386
        %v611 = vunpack.c.l.b16 %v387
        %v612 = vunpack.c.l.b16 %v388
        %v613 = vpack.c.b16 %v598, %v597
        %v614 = vpack.c.b16 %v600, %v599
        %v615 = vpack.c.b16 %v602, %v601
        %v616 = vpack.c.b16 %v604, %v603
        %v617 = vpack.c.b16 %v606, %v605
        %v618 = vpack.c.b16 %v608, %v607
        %v619 = vpack.c.b16 %v610, %v609
        %v620 = vpack.c.b16 %v612, %v611
        %629 = vmatprep.subr.bf16.mxu0 0
        %630 = vmatpush1.bf16.msra.mxu0 %v613
        %631 = vmatprep.subr.bf16.mxu0 0
        %632 = vmatpush1.bf16.msra.mxu0 %v614
        %633 = vmatprep.subr.bf16.mxu0 0
        %634 = vmatpush1.bf16.msra.mxu0 %v615
        %635 = vmatprep.subr.bf16.mxu0 0
        %636 = vmatpush1.bf16.msra.mxu0 %v616
        %637 = vmatprep.subr.bf16.mxu0 0
        %638 = vmatpush1.bf16.msra.mxu0 %v617
        %639 = vmatprep.subr.bf16.mxu0 0
        %640 = vmatpush1.bf16.msra.mxu0 %v618
        %641 = vmatprep.subr.bf16.mxu0 0
        %642 = vmatpush1.bf16.msra.mxu0 %v619
        %643 = vmatprep.subr.bf16.mxu0 0
        %644 = vmatpush1.bf16.msra.mxu0 %v620
        %645 = vmatprep.subr.bf16.mxu0 0
        %646 = vmatpush1.bf16.msra.mxu0 0
        %647 = vmatprep.subr.bf16.mxu0 0
        %648 = vmatpush1.bf16.msra.mxu0 0
        %649 = vmatprep.subr.bf16.mxu0 0
        %650 = vmatpush1.bf16.msra.mxu0 0
        %651 = vmatprep.subr.bf16.mxu0 0
        %652 = vmatpush1.bf16.msra.mxu0 0
        %653 = vmatprep.subr.bf16.mxu0 0
        %654 = vmatpush1.bf16.msra.mxu0 0
        %655 = vmatprep.subr.bf16.mxu0 0
        %656 = vmatpush1.bf16.msra.mxu0 0
        %657 = vmatprep.subr.bf16.mxu0 0
        %658 = vmatpush1.bf16.msra.mxu0 0
        %659 = vmatprep.subr.bf16.mxu0 0
        %660 = vmatpush1.bf16.msra.mxu0 0
        %661 = vmatprep.mubr.bf16.mxu0 0
        %662 = vmatmul.mubr.bf16.gmra.mrb[0].mxu0 %v517
        %v663 = vpop.f32.mrb[0].mxu0
        %v664 = vadd.f32 0.0, %v663
        %v665 = vpop.f32.mrb[0].mxu0
        %v666 = vpop.f32.mrb[0].mxu0
        %v667 = vadd.f32 0.0, %v666
        %v668 = vpop.f32.mrb[0].mxu0
        %669 = vmatprep.mubr.bf16.mxu0 0
        %670 = vmatmul.mubr.bf16.gmra.mrb[0].mxu0 %v518
        %v671 = vpop.f32.mrb[0].mxu0
        %v672 = vadd.f32 0.0, %v671
        %v673 = vpop.f32.mrb[0].mxu0
        %v674 = vpop.f32.mrb[0].mxu0
        %v675 = vadd.f32 0.0, %v674
        %v676 = vpop.f32.mrb[0].mxu0
        %677 = vmatprep.mubr.bf16.mxu0 0
        %678 = vmatmul.mubr.bf16.gmra.mrb[0].mxu0 %v519
        %v679 = vpop.f32.mrb[0].mxu0
        %v680 = vadd.f32 0.0, %v679
        %v681 = vpop.f32.mrb[0].mxu0
        %v682 = vpop.f32.mrb[0].mxu0
        %v683 = vadd.f32 0.0, %v682
        %v684 = vpop.f32.mrb[0].mxu0
        %685 = vmatprep.mubr.bf16.mxu0 0
        %686 = vmatmul.mubr.bf16.gmra.mrb[0].mxu0 %v520
        %v687 = vpop.f32.mrb[0].mxu0
        %v688 = vadd.f32 0.0, %v687
        %v689 = vpop.f32.mrb[0].mxu0
        %v690 = vpop.f32.mrb[0].mxu0
        %v691 = vadd.f32 0.0, %v690
        %v692 = vpop.f32.mrb[0].mxu0
        %693 = vmatprep.mubr.bf16.mxu0 0
        %694 = vmatmul.mubr.bf16.gmra.mrb[0].mxu0 %v521
        %v695 = vpop.f32.mrb[0].mxu0
        %v696 = vadd.f32 0.0, %v695
        %v697 = vpop.f32.mrb[0].mxu0
        %v698 = vpop.f32.mrb[0].mxu0
        %v699 = vadd.f32 0.0, %v698
        %v700 = vpop.f32.mrb[0].mxu0
        %701 = vmatprep.mubr.bf16.mxu0 0
        %702 = vmatmul.mubr.bf16.gmra.mrb[0].mxu0 %v522
        %v703 = vpop.f32.mrb[0].mxu0
        %v704 = vadd.f32 0.0, %v703
        %v705 = vpop.f32.mrb[0].mxu0
        %v706 = vpop.f32.mrb[0].mxu0
        %v707 = vadd.f32 0.0, %v706
        %v708 = vpop.f32.mrb[0].mxu0
        %709 = vmatprep.mubr.bf16.mxu0 0
        %710 = vmatmul.mubr.bf16.gmra.mrb[0].mxu0 %v523
        %v711 = vpop.f32.mrb[0].mxu0
        %v712 = vadd.f32 0.0, %v711
        %v713 = vpop.f32.mrb[0].mxu0
        %v714 = vpop.f32.mrb[0].mxu0
        %v715 = vadd.f32 0.0, %v714
        %v716 = vpop.f32.mrb[0].mxu0
        %717 = vmatprep.mubr.bf16.mxu0 0
        %718 = vmatmul.mubr.bf16.gmra.mrb[0].mxu0 %v524
        %v719 = vpop.f32.mrb[0].mxu0
        %v720 = vadd.f32 0.0, %v719
        %v721 = vpop.f32.mrb[0].mxu0
        %v722 = vpop.f32.mrb[0].mxu0
        %v723 = vadd.f32 0.0, %v722
        %v724 = vpop.f32.mrb[0].mxu0
        %725 = vmatprep.mubr.bf16.mxu0 0
        %726 = vmatmul.mubr.bf16.gmra.mrb[0].mxu0 %v525
        %v727 = vpop.f32.mrb[0].mxu0
        %v728 = vadd.f32 0.0, %v727
        %v729 = vpop.f32.mrb[0].mxu0
        %v730 = vpop.f32.mrb[0].mxu0
        %v731 = vadd.f32 0.0, %v730
        %v732 = vpop.f32.mrb[0].mxu0
        %733 = vmatprep.mubr.bf16.mxu0 0
        %734 = vmatmul.mubr.bf16.gmra.mrb[0].mxu0 %v526
        %v735 = vpop.f32.mrb[0].mxu0
        %v736 = vadd.f32 0.0, %v735
        %v737 = vpop.f32.mrb[0].mxu0
        %v738 = vpop.f32.mrb[0].mxu0
        %v739 = vadd.f32 0.0, %v738
        %v740 = vpop.f32.mrb[0].mxu0
        %741 = vmatprep.mubr.bf16.mxu0 0
        %742 = vmatmul.mubr.bf16.gmra.mrb[0].mxu0 %v527
        %v743 = vpop.f32.mrb[0].mxu0
        %v744 = vadd.f32 0.0, %v743
        %v745 = vpop.f32.mrb[0].mxu0
        %v746 = vpop.f32.mrb[0].mxu0
        %v747 = vadd.f32 0.0, %v746
        %v748 = vpop.f32.mrb[0].mxu0
        %749 = vmatprep.mubr.bf16.mxu0 0
        %750 = vmatmul.mubr.bf16.gmra.mrb[0].mxu0 %v528
        %v751 = vpop.f32.mrb[0].mxu0
        %v752 = vadd.f32 0.0, %v751
        %v753 = vpop.f32.mrb[0].mxu0
        %v754 = vpop.f32.mrb[0].mxu0
        %v755 = vadd.f32 0.0, %v754
        %v756 = vpop.f32.mrb[0].mxu0
        %757 = vmatprep.mubr.bf16.mxu0 0
        %758 = vmatmul.mubr.bf16.gmra.mrb[0].mxu0 %v529
        %v759 = vpop.f32.mrb[0].mxu0
        %v760 = vadd.f32 0.0, %v759
        %v761 = vpop.f32.mrb[0].mxu0
        %v762 = vpop.f32.mrb[0].mxu0
        %v763 = vadd.f32 0.0, %v762
        %v764 = vpop.f32.mrb[0].mxu0
        %765 = vmatprep.mubr.bf16.mxu0 0
        %766 = vmatmul.mubr.bf16.gmra.mrb[0].mxu0 %v530
        %v767 = vpop.f32.mrb[0].mxu0
        %v768 = vadd.f32 0.0, %v767
        %v769 = vpop.f32.mrb[0].mxu0
        %v770 = vpop.f32.mrb[0].mxu0
        %v771 = vadd.f32 0.0, %v770
        %v772 = vpop.f32.mrb[0].mxu0
        %773 = vmatprep.mubr.bf16.mxu0 0
        %774 = vmatmul.mubr.bf16.gmra.mrb[0].mxu0 %v531
        %v775 = vpop.f32.mrb[0].mxu0
        %v776 = vadd.f32 0.0, %v775
        %v777 = vpop.f32.mrb[0].mxu0
        %v778 = vpop.f32.mrb[0].mxu0
        %v779 = vadd.f32 0.0, %v778
        %v780 = vpop.f32.mrb[0].mxu0
        %781 = vmatprep.mubr.bf16.mxu0 0
        %782 = vmatmul.mubr.bf16.gmra.mrb[0].mxu0 %v532
        %v783 = vpop.f32.mrb[0].mxu0
        %v784 = vadd.f32 0.0, %v783
        %v785 = vpop.f32.mrb[0].mxu0
        %v786 = vpop.f32.mrb[0].mxu0
        %v787 = vadd.f32 0.0, %v786
        %v788 = vpop.f32.mrb[0].mxu0
        %789 = vmatprep.mubr.bf16.mxu0 0
        %790 = vmatmul.mubr.bf16.gmra.mrb[0].mxu0 %v533
        %v791 = vpop.f32.mrb[0].mxu0
        %v792 = vadd.f32 0.0, %v791
        %v793 = vpop.f32.mrb[0].mxu0
        %v794 = vpop.f32.mrb[0].mxu0
        %v795 = vadd.f32 0.0, %v794
        %v796 = vpop.f32.mrb[0].mxu0
        %797 = vmatprep.mubr.bf16.mxu0 0
        %798 = vmatmul.mubr.bf16.gmra.mrb[0].mxu0 %v534
        %v799 = vpop.f32.mrb[0].mxu0
        %v800 = vadd.f32 0.0, %v799
        %v801 = vpop.f32.mrb[0].mxu0
        %v802 = vpop.f32.mrb[0].mxu0
        %v803 = vadd.f32 0.0, %v802
        %v804 = vpop.f32.mrb[0].mxu0
        %805 = vmatprep.mubr.bf16.mxu0 0
        %806 = vmatmul.mubr.bf16.gmra.mrb[0].mxu0 %v535
        %v807 = vpop.f32.mrb[0].mxu0
        %v808 = vadd.f32 0.0, %v807
        %v809 = vpop.f32.mrb[0].mxu0
        %v810 = vpop.f32.mrb[0].mxu0
        %v811 = vadd.f32 0.0, %v810
        %v812 = vpop.f32.mrb[0].mxu0
        %813 = vmatprep.mubr.bf16.mxu0 0
        %814 = vmatmul.mubr.bf16.gmra.mrb[0].mxu0 %v536
        %v815 = vpop.f32.mrb[0].mxu0
        %v816 = vadd.f32 0.0, %v815
        %v817 = vpop.f32.mrb[0].mxu0
        %v818 = vpop.f32.mrb[0].mxu0
        %v819 = vadd.f32 0.0, %v818
        %v820 = vpop.f32.mrb[0].mxu0
        %821 = vmatprep.mubr.bf16.mxu0 0
        %822 = vmatmul.mubr.bf16.gmra.mrb[0].mxu0 %v537
        %v823 = vpop.f32.mrb[0].mxu0
        %v824 = vadd.f32 0.0, %v823
        %v825 = vpop.f32.mrb[0].mxu0
        %v826 = vpop.f32.mrb[0].mxu0
        %v827 = vadd.f32 0.0, %v826
        %v828 = vpop.f32.mrb[0].mxu0
        %829 = vmatprep.mubr.bf16.mxu0 0
        %830 = vmatmul.mubr.bf16.gmra.mrb[0].mxu0 %v538
        %v831 = vpop.f32.mrb[0].mxu0
        %v832 = vadd.f32 0.0, %v831
        %v833 = vpop.f32.mrb[0].mxu0
        %v834 = vpop.f32.mrb[0].mxu0
        %v835 = vadd.f32 0.0, %v834
        %v836 = vpop.f32.mrb[0].mxu0
        %837 = vmatprep.mubr.bf16.mxu0 0
        %838 = vmatmul.mubr.bf16.gmra.mrb[0].mxu0 %v539
        %v839 = vpop.f32.mrb[0].mxu0
        %v840 = vadd.f32 0.0, %v839
        %v841 = vpop.f32.mrb[0].mxu0
        %v842 = vpop.f32.mrb[0].mxu0
        %v843 = vadd.f32 0.0, %v842
        %v844 = vpop.f32.mrb[0].mxu0
        %845 = vmatprep.mubr.bf16.mxu0 0
        %846 = vmatmul.mubr.bf16.gmra.mrb[0].mxu0 %v540
        %v847 = vpop.f32.mrb[0].mxu0
        %v848 = vadd.f32 0.0, %v847
        %v849 = vpop.f32.mrb[0].mxu0
        %v850 = vpop.f32.mrb[0].mxu0
        %v851 = vadd.f32 0.0, %v850
        %v852 = vpop.f32.mrb[0].mxu0
        %853 = vmatprep.mubr.bf16.mxu0 0
        %854 = vmatmul.mubr.bf16.gmra.mrb[0].mxu0 %v541
        %v855 = vpop.f32.mrb[0].mxu0
        %v856 = vadd.f32 0.0, %v855
        %v857 = vpop.f32.mrb[0].mxu0
        %v858 = vpop.f32.mrb[0].mxu0
        %v859 = vadd.f32 0.0, %v858
        %v860 = vpop.f32.mrb[0].mxu0
        %861 = vmatprep.mubr.bf16.mxu0 0
        %862 = vmatmul.mubr.bf16.gmra.mrb[0].mxu0 %v542
        %v863 = vpop.f32.mrb[0].mxu0
        %v864 = vadd.f32 0.0, %v863
        %v865 = vpop.f32.mrb[0].mxu0
        %v866 = vpop.f32.mrb[0].mxu0
        %v867 = vadd.f32 0.0, %v866
        %v868 = vpop.f32.mrb[0].mxu0
        %869 = vmatprep.mubr.bf16.mxu0 0
        %870 = vmatmul.mubr.bf16.gmra.mrb[0].mxu0 %v543
        %v871 = vpop.f32.mrb[0].mxu0
        %v872 = vadd.f32 0.0, %v871
        %v873 = vpop.f32.mrb[0].mxu0
        %v874 = vpop.f32.mrb[0].mxu0
        %v875 = vadd.f32 0.0, %v874
        %v876 = vpop.f32.mrb[0].mxu0
        %877 = vmatprep.mubr.bf16.mxu0 0
        %878 = vmatmul.mubr.bf16.gmra.mrb[0].mxu0 %v544
        %v879 = vpop.f32.mrb[0].mxu0
        %v880 = vadd.f32 0.0, %v879
        %v881 = vpop.f32.mrb[0].mxu0
        %v882 = vpop.f32.mrb[0].mxu0
        %v883 = vadd.f32 0.0, %v882
        %v884 = vpop.f32.mrb[0].mxu0
        %885 = vmatprep.mubr.bf16.mxu0 0
        %886 = vmatmul.mubr.bf16.gmra.mrb[0].mxu0 %v545
        %v887 = vpop.f32.mrb[0].mxu0
        %v888 = vadd.f32 0.0, %v887
        %v889 = vpop.f32.mrb[0].mxu0
        %v890 = vpop.f32.mrb[0].mxu0
        %v891 = vadd.f32 0.0, %v890
        %v892 = vpop.f32.mrb[0].mxu0
        %893 = vmatprep.mubr.bf16.mxu0 0
        %894 = vmatmul.mubr.bf16.gmra.mrb[0].mxu0 %v546
        %v895 = vpop.f32.mrb[0].mxu0
        %v896 = vadd.f32 0.0, %v895
        %v897 = vpop.f32.mrb[0].mxu0
        %v898 = vpop.f32.mrb[0].mxu0
        %v899 = vadd.f32 0.0, %v898
        %v900 = vpop.f32.mrb[0].mxu0
        %901 = vmatprep.mubr.bf16.mxu0 0
        %902 = vmatmul.mubr.bf16.gmra.mrb[0].mxu0 %v547
        %v903 = vpop.f32.mrb[0].mxu0
        %v904 = vadd.f32 0.0, %v903
        %v905 = vpop.f32.mrb[0].mxu0
        %v906 = vpop.f32.mrb[0].mxu0
        %v907 = vadd.f32 0.0, %v906
        %v908 = vpop.f32.mrb[0].mxu0
        %909 = vmatprep.mubr.bf16.mxu0 0
        %910 = vmatmul.mubr.bf16.gmra.mrb[0].mxu0 %v548
        %v911 = vpop.f32.mrb[0].mxu0
        %v912 = vadd.f32 0.0, %v911
        %v913 = vpop.f32.mrb[0].mxu0
        %v914 = vpop.f32.mrb[0].mxu0
        %v915 = vadd.f32 0.0, %v914
        %v916 = vpop.f32.mrb[0].mxu0
        %917 = vdwg.mxu0
        %v918 = vld [vmem:[#allocation2] sm:$0xff]
        %v919 = vld [vmem:[#allocation2 + $0x8] sm:$0xff]
        %v920 = vld [vmem:[#allocation2 + $0x10] sm:$0xff]
        %v921 = vld [vmem:[#allocation2 + $0x18] sm:$0xff]
        %v922 = vld [vmem:[#allocation2 + $0x20] sm:$0xff]
        %v923 = vld [vmem:[#allocation2 + $0x28] sm:$0xff]
        %v924 = vld [vmem:[#allocation2 + $0x30] sm:$0xff]
        %v925 = vld [vmem:[#allocation2 + $0x38] sm:$0xff]
        %v926 = vld [vmem:[#allocation2 + $0x40] sm:$0xff]
        %v927 = vld [vmem:[#allocation2 + $0x48] sm:$0xff]
        %v928 = vld [vmem:[#allocation2 + $0x50] sm:$0xff]
        %v929 = vld [vmem:[#allocation2 + $0x58] sm:$0xff]
        %v930 = vld [vmem:[#allocation2 + $0x60] sm:$0xff]
        %v931 = vld [vmem:[#allocation2 + $0x68] sm:$0xff]
        %v932 = vld [vmem:[#allocation2 + $0x70] sm:$0xff]
        %v933 = vld [vmem:[#allocation2 + $0x78] sm:$0xff]
        %v934 = vld [vmem:[#allocation2 + $0x80] sm:$0xff]
        %v935 = vld [vmem:[#allocation2 + $0x88] sm:$0xff]
        %v936 = vld [vmem:[#allocation2 + $0x90] sm:$0xff]
        %v937 = vld [vmem:[#allocation2 + $0x98] sm:$0xff]
        %v938 = vld [vmem:[#allocation2 + $0xa0] sm:$0xff]
        %v939 = vld [vmem:[#allocation2 + $0xa8] sm:$0xff]
        %v940 = vld [vmem:[#allocation2 + $0xb0] sm:$0xff]
        %v941 = vld [vmem:[#allocation2 + $0xb8] sm:$0xff]
        %v942 = vld [vmem:[#allocation2 + $0xc0] sm:$0xff]
        %v943 = vld [vmem:[#allocation2 + $0xc8] sm:$0xff]
        %v944 = vld [vmem:[#allocation2 + $0xd0] sm:$0xff]
        %v945 = vld [vmem:[#allocation2 + $0xd8] sm:$0xff]
        %v946 = vld [vmem:[#allocation2 + $0xe0] sm:$0xff]
        %v947 = vld [vmem:[#allocation2 + $0xe8] sm:$0xff]
        %v948 = vld [vmem:[#allocation2 + $0xf0] sm:$0xff]
        %v949 = vld [vmem:[#allocation2 + $0xf8] sm:$0xff]
        %v950 = vld [vmem:[%s243] sm:$0xff]
        %v951 = vld [vmem:[%s243 + $0x8] sm:$0xff]
        %v952 = vld [vmem:[%s243 + $0x10] sm:$0xff]
        %v953 = vld [vmem:[%s243 + $0x18] sm:$0xff]
        %v954 = vld [vmem:[%s243 + $0x20] sm:$0xff]
        %v955 = vld [vmem:[%s243 + $0x28] sm:$0xff]
        %v956 = vld [vmem:[%s243 + $0x30] sm:$0xff]
        %v957 = vld [vmem:[%s243 + $0x38] sm:$0xff]
        %v958 = vld [vmem:[%s243 + $0x40] sm:$0xff]
        %v959 = vld [vmem:[%s243 + $0x48] sm:$0xff]
        %v960 = vld [vmem:[%s243 + $0x50] sm:$0xff]
        %v961 = vld [vmem:[%s243 + $0x58] sm:$0xff]
        %v962 = vld [vmem:[%s243 + $0x60] sm:$0xff]
        %v963 = vld [vmem:[%s243 + $0x68] sm:$0xff]
        %v964 = vld [vmem:[%s243 + $0x70] sm:$0xff]
        %v965 = vld [vmem:[%s243 + $0x78] sm:$0xff]
        %v966 = vld [vmem:[%s243 + $0x80] sm:$0xff]
        %v967 = vld [vmem:[%s243 + $0x88] sm:$0xff]
        %v968 = vld [vmem:[%s243 + $0x90] sm:$0xff]
        %v969 = vld [vmem:[%s243 + $0x98] sm:$0xff]
        %v970 = vld [vmem:[%s243 + $0xa0] sm:$0xff]
        %v971 = vld [vmem:[%s243 + $0xa8] sm:$0xff]
        %v972 = vld [vmem:[%s243 + $0xb0] sm:$0xff]
        %v973 = vld [vmem:[%s243 + $0xb8] sm:$0xff]
        %v974 = vld [vmem:[%s243 + $0xc0] sm:$0xff]
        %v975 = vld [vmem:[%s243 + $0xc8] sm:$0xff]
        %v976 = vld [vmem:[%s243 + $0xd0] sm:$0xff]
        %v977 = vld [vmem:[%s243 + $0xd8] sm:$0xff]
        %v978 = vld [vmem:[%s243 + $0xe0] sm:$0xff]
        %v979 = vld [vmem:[%s243 + $0xe8] sm:$0xff]
        %v980 = vld [vmem:[%s243 + $0xf0] sm:$0xff]
        %v981 = vld [vmem:[%s243 + $0xf8] sm:$0xff]
        %v982 = vld [vmem:[%s243 + $0x100] sm:$0xff]
        %v983 = vld [vmem:[%s243 + $0x108] sm:$0xff]
        %v984 = vld [vmem:[%s243 + $0x110] sm:$0xff]
        %v985 = vld [vmem:[%s243 + $0x118] sm:$0xff]
        %v986 = vld [vmem:[%s243 + $0x120] sm:$0xff]
        %v987 = vld [vmem:[%s243 + $0x128] sm:$0xff]
        %v988 = vld [vmem:[%s243 + $0x130] sm:$0xff]
        %v989 = vld [vmem:[%s243 + $0x138] sm:$0xff]
        %v990 = vld [vmem:[%s243 + $0x140] sm:$0xff]
        %v991 = vld [vmem:[%s243 + $0x148] sm:$0xff]
        %v992 = vld [vmem:[%s243 + $0x150] sm:$0xff]
        %v993 = vld [vmem:[%s243 + $0x158] sm:$0xff]
        %v994 = vld [vmem:[%s243 + $0x160] sm:$0xff]
        %v995 = vld [vmem:[%s243 + $0x168] sm:$0xff]
        %v996 = vld [vmem:[%s243 + $0x170] sm:$0xff]
        %v997 = vld [vmem:[%s243 + $0x178] sm:$0xff]
        %v998 = vld [vmem:[%s243 + $0x180] sm:$0xff]
        %v999 = vld [vmem:[%s243 + $0x188] sm:$0xff]
        %v1000 = vld [vmem:[%s243 + $0x190] sm:$0xff]
        %v1001 = vld [vmem:[%s243 + $0x198] sm:$0xff]
        %v1002 = vld [vmem:[%s243 + $0x1a0] sm:$0xff]
        %v1003 = vld [vmem:[%s243 + $0x1a8] sm:$0xff]
        %v1004 = vld [vmem:[%s243 + $0x1b0] sm:$0xff]
        %v1005 = vld [vmem:[%s243 + $0x1b8] sm:$0xff]
        %v1006 = vld [vmem:[%s243 + $0x1c0] sm:$0xff]
        %v1007 = vld [vmem:[%s243 + $0x1c8] sm:$0xff]
        %v1008 = vld [vmem:[%s243 + $0x1d0] sm:$0xff]
        %v1009 = vld [vmem:[%s243 + $0x1d8] sm:$0xff]
        %v1010 = vld [vmem:[%s243 + $0x1e0] sm:$0xff]
        %v1011 = vld [vmem:[%s243 + $0x1e8] sm:$0xff]
        %v1012 = vld [vmem:[%s243 + $0x1f0] sm:$0xff]
        %v1013 = vld [vmem:[%s243 + $0x1f8] sm:$0xff]
        %v1014 = vpack.c.bf16 %v667, %v664
        %v1015 = vpack.c.bf16 %v675, %v672
        %v1016 = vpack.c.bf16 %v683, %v680
        %v1017 = vpack.c.bf16 %v691, %v688
        %v1018 = vpack.c.bf16 %v699, %v696
        %v1019 = vpack.c.bf16 %v707, %v704
        %v1020 = vpack.c.bf16 %v715, %v712
        %v1021 = vpack.c.bf16 %v723, %v720
        %v1022 = vpack.c.bf16 %v731, %v728
        %v1023 = vpack.c.bf16 %v739, %v736
        %v1024 = vpack.c.bf16 %v747, %v744
        %v1025 = vpack.c.bf16 %v755, %v752
        %v1026 = vpack.c.bf16 %v763, %v760
        %v1027 = vpack.c.bf16 %v771, %v768
        %v1028 = vpack.c.bf16 %v779, %v776
        %v1029 = vpack.c.bf16 %v787, %v784
        %v1030 = vpack.c.bf16 %v795, %v792
        %v1031 = vpack.c.bf16 %v803, %v800
        %v1032 = vpack.c.bf16 %v811, %v808
        %v1033 = vpack.c.bf16 %v819, %v816
        %v1034 = vpack.c.bf16 %v827, %v824
        %v1035 = vpack.c.bf16 %v835, %v832
        %v1036 = vpack.c.bf16 %v843, %v840
        %v1037 = vpack.c.bf16 %v851, %v848
        %v1038 = vpack.c.bf16 %v859, %v856
        %v1039 = vpack.c.bf16 %v867, %v864
        %v1040 = vpack.c.bf16 %v875, %v872
        %v1041 = vpack.c.bf16 %v883, %v880
        %v1042 = vpack.c.bf16 %v891, %v888
        %v1043 = vpack.c.bf16 %v899, %v896
        %v1044 = vpack.c.bf16 %v907, %v904
        %v1045 = vpack.c.bf16 %v915, %v912
        %v1110 = vunpack.c.l.b16 %v950
        %v1111 = vunpack.c.h.b16 %v950
        %v1112 = vunpack.c.l.b16 %v951
        %v1113 = vunpack.c.h.b16 %v951
        %v1114 = vunpack.c.l.b16 %v952
        %v1115 = vunpack.c.h.b16 %v952
        %v1116 = vunpack.c.l.b16 %v953
        %v1117 = vunpack.c.h.b16 %v953
        %v1118 = vunpack.c.l.b16 %v954
        %v1119 = vunpack.c.h.b16 %v954
        %v1120 = vunpack.c.l.b16 %v955
        %v1121 = vunpack.c.h.b16 %v955
        %v1122 = vunpack.c.l.b16 %v956
        %v1123 = vunpack.c.h.b16 %v956
        %v1124 = vunpack.c.l.b16 %v957
        %v1125 = vunpack.c.h.b16 %v957
        %v1126 = vunpack.c.l.b16 %v958
        %v1127 = vunpack.c.h.b16 %v958
        %v1128 = vunpack.c.l.b16 %v959
        %v1129 = vunpack.c.h.b16 %v959
        %v1130 = vunpack.c.l.b16 %v960
        %v1131 = vunpack.c.h.b16 %v960
        %v1132 = vunpack.c.l.b16 %v961
        %v1133 = vunpack.c.h.b16 %v961
        %v1134 = vunpack.c.l.b16 %v962
        %v1135 = vunpack.c.h.b16 %v962
        %v1136 = vunpack.c.l.b16 %v963
        %v1137 = vunpack.c.h.b16 %v963
        %v1138 = vunpack.c.l.b16 %v964
        %v1139 = vunpack.c.h.b16 %v964
        %v1140 = vunpack.c.l.b16 %v965
        %v1141 = vunpack.c.h.b16 %v965
        %v1142 = vunpack.c.l.b16 %v966
        %v1143 = vunpack.c.h.b16 %v966
        %v1144 = vunpack.c.l.b16 %v967
        %v1145 = vunpack.c.h.b16 %v967
        %v1146 = vunpack.c.l.b16 %v968
        %v1147 = vunpack.c.h.b16 %v968
        %v1148 = vunpack.c.l.b16 %v969
        %v1149 = vunpack.c.h.b16 %v969
        %v1150 = vunpack.c.l.b16 %v970
        %v1151 = vunpack.c.h.b16 %v970
        %v1152 = vunpack.c.l.b16 %v971
        %v1153 = vunpack.c.h.b16 %v971
        %v1154 = vunpack.c.l.b16 %v972
        %v1155 = vunpack.c.h.b16 %v972
        %v1156 = vunpack.c.l.b16 %v973
        %v1157 = vunpack.c.h.b16 %v973
        %v1158 = vunpack.c.l.b16 %v974
        %v1159 = vunpack.c.h.b16 %v974
        %v1160 = vunpack.c.l.b16 %v975
        %v1161 = vunpack.c.h.b16 %v975
        %v1162 = vunpack.c.l.b16 %v976
        %v1163 = vunpack.c.h.b16 %v976
        %v1164 = vunpack.c.l.b16 %v977
        %v1165 = vunpack.c.h.b16 %v977
        %v1166 = vunpack.c.l.b16 %v978
        %v1167 = vunpack.c.h.b16 %v978
        %v1168 = vunpack.c.l.b16 %v979
        %v1169 = vunpack.c.h.b16 %v979
        %v1170 = vunpack.c.l.b16 %v980
        %v1171 = vunpack.c.h.b16 %v980
        %v1172 = vunpack.c.l.b16 %v981
        %v1173 = vunpack.c.h.b16 %v981
        %v1174 = vunpack.c.l.b16 %v982
        %v1175 = vunpack.c.h.b16 %v982
        %v1176 = vunpack.c.l.b16 %v983
        %v1177 = vunpack.c.h.b16 %v983
        %v1178 = vunpack.c.l.b16 %v984
        %v1179 = vunpack.c.h.b16 %v984
        %v1180 = vunpack.c.l.b16 %v985
        %v1181 = vunpack.c.h.b16 %v985
        %v1182 = vunpack.c.l.b16 %v986
        %v1183 = vunpack.c.h.b16 %v986
        %v1184 = vunpack.c.l.b16 %v987
        %v1185 = vunpack.c.h.b16 %v987
        %v1186 = vunpack.c.l.b16 %v988
        %v1187 = vunpack.c.h.b16 %v988
        %v1188 = vunpack.c.l.b16 %v989
        %v1189 = vunpack.c.h.b16 %v989
        %v1190 = vunpack.c.l.b16 %v990
        %v1191 = vunpack.c.h.b16 %v990
        %v1192 = vunpack.c.l.b16 %v991
        %v1193 = vunpack.c.h.b16 %v991
        %v1194 = vunpack.c.l.b16 %v992
        %v1195 = vunpack.c.h.b16 %v992
        %v1196 = vunpack.c.l.b16 %v993
        %v1197 = vunpack.c.h.b16 %v993
        %v1198 = vunpack.c.l.b16 %v994
        %v1199 = vunpack.c.h.b16 %v994
        %v1200 = vunpack.c.l.b16 %v995
        %v1201 = vunpack.c.h.b16 %v995
        %v1202 = vunpack.c.l.b16 %v996
        %v1203 = vunpack.c.h.b16 %v996
        %v1204 = vunpack.c.l.b16 %v997
        %v1205 = vunpack.c.h.b16 %v997
        %v1206 = vunpack.c.l.b16 %v998
        %v1207 = vunpack.c.h.b16 %v998
        %v1208 = vunpack.c.l.b16 %v999
        %v1209 = vunpack.c.h.b16 %v999
        %v1210 = vunpack.c.l.b16 %v1000
        %v1211 = vunpack.c.h.b16 %v1000
        %v1212 = vunpack.c.l.b16 %v1001
        %v1213 = vunpack.c.h.b16 %v1001
        %v1214 = vunpack.c.l.b16 %v1002
        %v1215 = vunpack.c.h.b16 %v1002
        %v1216 = vunpack.c.l.b16 %v1003
        %v1217 = vunpack.c.h.b16 %v1003
        %v1218 = vunpack.c.l.b16 %v1004
        %v1219 = vunpack.c.h.b16 %v1004
        %v1220 = vunpack.c.l.b16 %v1005
        %v1221 = vunpack.c.h.b16 %v1005
        %v1222 = vunpack.c.l.b16 %v1006
        %v1223 = vunpack.c.h.b16 %v1006
        %v1224 = vunpack.c.l.b16 %v1007
        %v1225 = vunpack.c.h.b16 %v1007
        %v1226 = vunpack.c.l.b16 %v1008
        %v1227 = vunpack.c.h.b16 %v1008
        %v1228 = vunpack.c.l.b16 %v1009
        %v1229 = vunpack.c.h.b16 %v1009
        %v1230 = vunpack.c.l.b16 %v1010
        %v1231 = vunpack.c.h.b16 %v1010
        %v1232 = vunpack.c.l.b16 %v1011
        %v1233 = vunpack.c.h.b16 %v1011
        %v1234 = vunpack.c.l.b16 %v1012
        %v1235 = vunpack.c.h.b16 %v1012
        %v1236 = vunpack.c.l.b16 %v1013
        %v1237 = vunpack.c.h.b16 %v1013
        %v1238 = vpack.c.b16 %v1114, %v1110
        %v1239 = vpack.c.b16 %v1115, %v1111
        %v1240 = vpack.c.b16 %v1116, %v1112
        %v1241 = vpack.c.b16 %v1117, %v1113
        %v1242 = vpack.c.b16 %v1122, %v1118
        %v1243 = vpack.c.b16 %v1123, %v1119
        %v1244 = vpack.c.b16 %v1124, %v1120
        %v1245 = vpack.c.b16 %v1125, %v1121
        %v1246 = vpack.c.b16 %v1130, %v1126
        %v1247 = vpack.c.b16 %v1131, %v1127
        %v1248 = vpack.c.b16 %v1132, %v1128
        %v1249 = vpack.c.b16 %v1133, %v1129
        %v1250 = vpack.c.b16 %v1138, %v1134
        %v1251 = vpack.c.b16 %v1139, %v1135
        %v1252 = vpack.c.b16 %v1140, %v1136
        %v1253 = vpack.c.b16 %v1141, %v1137
        %v1254 = vpack.c.b16 %v1146, %v1142
        %v1255 = vpack.c.b16 %v1147, %v1143
        %v1256 = vpack.c.b16 %v1148, %v1144
        %v1257 = vpack.c.b16 %v1149, %v1145
        %v1258 = vpack.c.b16 %v1154, %v1150
        %v1259 = vpack.c.b16 %v1155, %v1151
        %v1260 = vpack.c.b16 %v1156, %v1152
        %v1261 = vpack.c.b16 %v1157, %v1153
        %v1262 = vpack.c.b16 %v1162, %v1158
        %v1263 = vpack.c.b16 %v1163, %v1159
        %v1264 = vpack.c.b16 %v1164, %v1160
        %v1265 = vpack.c.b16 %v1165, %v1161
        %v1266 = vpack.c.b16 %v1170, %v1166
        %v1267 = vpack.c.b16 %v1171, %v1167
        %v1268 = vpack.c.b16 %v1172, %v1168
        %v1269 = vpack.c.b16 %v1173, %v1169
        %v1270 = vpack.c.b16 %v1178, %v1174
        %v1271 = vpack.c.b16 %v1179, %v1175
        %v1272 = vpack.c.b16 %v1180, %v1176
        %v1273 = vpack.c.b16 %v1181, %v1177
        %v1274 = vpack.c.b16 %v1186, %v1182
        %v1275 = vpack.c.b16 %v1187, %v1183
        %v1276 = vpack.c.b16 %v1188, %v1184
        %v1277 = vpack.c.b16 %v1189, %v1185
        %v1278 = vpack.c.b16 %v1194, %v1190
        %v1279 = vpack.c.b16 %v1195, %v1191
        %v1280 = vpack.c.b16 %v1196, %v1192
        %v1281 = vpack.c.b16 %v1197, %v1193
        %v1282 = vpack.c.b16 %v1202, %v1198
        %v1283 = vpack.c.b16 %v1203, %v1199
        %v1284 = vpack.c.b16 %v1204, %v1200
        %v1285 = vpack.c.b16 %v1205, %v1201
        %v1286 = vpack.c.b16 %v1210, %v1206
        %v1287 = vpack.c.b16 %v1211, %v1207
        %v1288 = vpack.c.b16 %v1212, %v1208
        %v1289 = vpack.c.b16 %v1213, %v1209
        %v1290 = vpack.c.b16 %v1218, %v1214
        %v1291 = vpack.c.b16 %v1219, %v1215
        %v1292 = vpack.c.b16 %v1220, %v1216
        %v1293 = vpack.c.b16 %v1221, %v1217
        %v1294 = vpack.c.b16 %v1226, %v1222
        %v1295 = vpack.c.b16 %v1227, %v1223
        %v1296 = vpack.c.b16 %v1228, %v1224
        %v1297 = vpack.c.b16 %v1229, %v1225
        %v1298 = vpack.c.b16 %v1234, %v1230
        %v1299 = vpack.c.b16 %v1235, %v1231
        %v1300 = vpack.c.b16 %v1236, %v1232
        %v1301 = vpack.c.b16 %v1237, %v1233
        %1366 = vmatprep.subr.bf16.mxu0 0
        %1367 = vmatpush1.bf16.msra.mxu0 %v1014
        %1368 = vmatprep.subr.bf16.mxu0 0
        %1369 = vmatpush1.bf16.msra.mxu0 %v1015
        %1370 = vmatprep.subr.bf16.mxu0 0
        %1371 = vmatpush1.bf16.msra.mxu0 %v1016
        %1372 = vmatprep.subr.bf16.mxu0 0
        %1373 = vmatpush1.bf16.msra.mxu0 %v1017
        %1374 = vmatprep.subr.bf16.mxu0 0
        %1375 = vmatpush1.bf16.msra.mxu0 %v1018
        %1376 = vmatprep.subr.bf16.mxu0 0
        %1377 = vmatpush1.bf16.msra.mxu0 %v1019
        %1378 = vmatprep.subr.bf16.mxu0 0
        %1379 = vmatpush1.bf16.msra.mxu0 %v1020
        %1380 = vmatprep.subr.bf16.mxu0 0
        %1381 = vmatpush1.bf16.msra.mxu0 %v1021
        %1382 = vmatprep.subr.bf16.mxu0 0
        %1383 = vmatpush1.bf16.msra.mxu0 %v1022
        %1384 = vmatprep.subr.bf16.mxu0 0
        %1385 = vmatpush1.bf16.msra.mxu0 %v1023
        %1386 = vmatprep.subr.bf16.mxu0 0
        %1387 = vmatpush1.bf16.msra.mxu0 %v1024
        %1388 = vmatprep.subr.bf16.mxu0 0
        %1389 = vmatpush1.bf16.msra.mxu0 %v1025
        %1390 = vmatprep.subr.bf16.mxu0 0
        %1391 = vmatpush1.bf16.msra.mxu0 %v1026
        %1392 = vmatprep.subr.bf16.mxu0 0
        %1393 = vmatpush1.bf16.msra.mxu0 %v1027
        %1394 = vmatprep.subr.bf16.mxu0 0
        %1395 = vmatpush1.bf16.msra.mxu0 %v1028
        %1396 = vmatprep.subr.bf16.mxu0 0
        %1397 = vmatpush1.bf16.msra.mxu0 %v1029
        %1398 = vmatprep.mubr.bf16.mxu0 %v1239
        %1399 = vmatmul.mubr.bf16.gmra.mrb[0].mxu0 %v1238
        %v1400 = vpop.f32.mrb[0].mxu0
        %v1401 = vadd.f32 0.0, %v1400
        %v1402 = vpop.f32.mrb[0].mxu0
        %v1403 = vpop.f32.mrb[0].mxu0
        %v1404 = vadd.f32 0.0, %v1403
        %v1405 = vpop.f32.mrb[0].mxu0
        %1406 = vmatprep.mubr.bf16.mxu0 %v1243
        %1407 = vmatmul.mubr.bf16.gmra.mrb[0].mxu0 %v1242
        %v1408 = vpop.f32.mrb[0].mxu0
        %v1409 = vadd.f32 0.0, %v1408
        %v1410 = vpop.f32.mrb[0].mxu0
        %v1411 = vpop.f32.mrb[0].mxu0
        %v1412 = vadd.f32 0.0, %v1411
        %v1413 = vpop.f32.mrb[0].mxu0
        %1414 = vmatprep.mubr.bf16.mxu0 %v1247
        %1415 = vmatmul.mubr.bf16.gmra.mrb[0].mxu0 %v1246
        %v1416 = vpop.f32.mrb[0].mxu0
        %v1417 = vadd.f32 0.0, %v1416
        %v1418 = vpop.f32.mrb[0].mxu0
        %v1419 = vpop.f32.mrb[0].mxu0
        %v1420 = vadd.f32 0.0, %v1419
        %v1421 = vpop.f32.mrb[0].mxu0
        %1422 = vmatprep.mubr.bf16.mxu0 %v1251
        %1423 = vmatmul.mubr.bf16.gmra.mrb[0].mxu0 %v1250
        %v1424 = vpop.f32.mrb[0].mxu0
        %v1425 = vadd.f32 0.0, %v1424
        %v1426 = vpop.f32.mrb[0].mxu0
        %v1427 = vpop.f32.mrb[0].mxu0
        %v1428 = vadd.f32 0.0, %v1427
        %v1429 = vpop.f32.mrb[0].mxu0
        %1430 = vmatprep.mubr.bf16.mxu0 %v1255
        %1431 = vmatmul.mubr.bf16.gmra.mrb[0].mxu0 %v1254
        %v1432 = vpop.f32.mrb[0].mxu0
        %v1433 = vadd.f32 0.0, %v1432
        %v1434 = vpop.f32.mrb[0].mxu0
        %v1435 = vpop.f32.mrb[0].mxu0
        %v1436 = vadd.f32 0.0, %v1435
        %v1437 = vpop.f32.mrb[0].mxu0
        %1438 = vmatprep.mubr.bf16.mxu0 %v1259
        %1439 = vmatmul.mubr.bf16.gmra.mrb[0].mxu0 %v1258
        %v1440 = vpop.f32.mrb[0].mxu0
        %v1441 = vadd.f32 0.0, %v1440
        %v1442 = vpop.f32.mrb[0].mxu0
        %v1443 = vpop.f32.mrb[0].mxu0
        %v1444 = vadd.f32 0.0, %v1443
        %v1445 = vpop.f32.mrb[0].mxu0
        %1446 = vmatprep.mubr.bf16.mxu0 %v1263
        %1447 = vmatmul.mubr.bf16.gmra.mrb[0].mxu0 %v1262
        %v1448 = vpop.f32.mrb[0].mxu0
        %v1449 = vadd.f32 0.0, %v1448
        %v1450 = vpop.f32.mrb[0].mxu0
        %v1451 = vpop.f32.mrb[0].mxu0
        %v1452 = vadd.f32 0.0, %v1451
        %v1453 = vpop.f32.mrb[0].mxu0
        %1454 = vmatprep.mubr.bf16.mxu0 %v1267
        %1455 = vmatmul.mubr.bf16.gmra.mrb[0].mxu0 %v1266
        %v1456 = vpop.f32.mrb[0].mxu0
        %v1457 = vadd.f32 0.0, %v1456
        %v1458 = vpop.f32.mrb[0].mxu0
        %v1459 = vpop.f32.mrb[0].mxu0
        %v1460 = vadd.f32 0.0, %v1459
        %v1461 = vpop.f32.mrb[0].mxu0
        %1462 = vmatprep.mubr.bf16.mxu0 %v1271
        %1463 = vmatmul.mubr.bf16.gmra.mrb[0].mxu0 %v1270
        %v1464 = vpop.f32.mrb[0].mxu0
        %v1465 = vadd.f32 0.0, %v1464
        %v1466 = vpop.f32.mrb[0].mxu0
        %v1467 = vpop.f32.mrb[0].mxu0
        %v1468 = vadd.f32 0.0, %v1467
        %v1469 = vpop.f32.mrb[0].mxu0
        %1470 = vmatprep.mubr.bf16.mxu0 %v1275
        %1471 = vmatmul.mubr.bf16.gmra.mrb[0].mxu0 %v1274
        %v1472 = vpop.f32.mrb[0].mxu0
        %v1473 = vadd.f32 0.0, %v1472
        %v1474 = vpop.f32.mrb[0].mxu0
        %v1475 = vpop.f32.mrb[0].mxu0
        %v1476 = vadd.f32 0.0, %v1475
        %v1477 = vpop.f32.mrb[0].mxu0
        %1478 = vmatprep.mubr.bf16.mxu0 %v1279
        %1479 = vmatmul.mubr.bf16.gmra.mrb[0].mxu0 %v1278
        %v1480 = vpop.f32.mrb[0].mxu0
        %v1481 = vadd.f32 0.0, %v1480
        %v1482 = vpop.f32.mrb[0].mxu0
        %v1483 = vpop.f32.mrb[0].mxu0
        %v1484 = vadd.f32 0.0, %v1483
        %v1485 = vpop.f32.mrb[0].mxu0
        %1486 = vmatprep.mubr.bf16.mxu0 %v1283
        %1487 = vmatmul.mubr.bf16.gmra.mrb[0].mxu0 %v1282
        %v1488 = vpop.f32.mrb[0].mxu0
        %v1489 = vadd.f32 0.0, %v1488
        %v1490 = vpop.f32.mrb[0].mxu0
        %v1491 = vpop.f32.mrb[0].mxu0
        %v1492 = vadd.f32 0.0, %v1491
        %v1493 = vpop.f32.mrb[0].mxu0
        %1494 = vmatprep.mubr.bf16.mxu0 %v1287
        %1495 = vmatmul.mubr.bf16.gmra.mrb[0].mxu0 %v1286
        %v1496 = vpop.f32.mrb[0].mxu0
        %v1497 = vadd.f32 0.0, %v1496
        %v1498 = vpop.f32.mrb[0].mxu0
        %v1499 = vpop.f32.mrb[0].mxu0
        %v1500 = vadd.f32 0.0, %v1499
        %v1501 = vpop.f32.mrb[0].mxu0
        %1502 = vmatprep.mubr.bf16.mxu0 %v1291
        %1503 = vmatmul.mubr.bf16.gmra.mrb[0].mxu0 %v1290
        %v1504 = vpop.f32.mrb[0].mxu0
        %v1505 = vadd.f32 0.0, %v1504
        %v1506 = vpop.f32.mrb[0].mxu0
        %v1507 = vpop.f32.mrb[0].mxu0
        %v1508 = vadd.f32 0.0, %v1507
        %v1509 = vpop.f32.mrb[0].mxu0
        %1510 = vmatprep.mubr.bf16.mxu0 %v1295
        %1511 = vmatmul.mubr.bf16.gmra.mrb[0].mxu0 %v1294
        %v1512 = vpop.f32.mrb[0].mxu0
        %v1513 = vadd.f32 0.0, %v1512
        %v1514 = vpop.f32.mrb[0].mxu0
        %v1515 = vpop.f32.mrb[0].mxu0
        %v1516 = vadd.f32 0.0, %v1515
        %v1517 = vpop.f32.mrb[0].mxu0
        %1518 = vmatprep.mubr.bf16.mxu0 %v1299
        %1519 = vmatmul.mubr.bf16.gmra.mrb[0].mxu0 %v1298
        %v1520 = vpop.f32.mrb[0].mxu0
        %v1521 = vadd.f32 0.0, %v1520
        %v1522 = vpop.f32.mrb[0].mxu0
        %v1523 = vpop.f32.mrb[0].mxu0
        %v1524 = vadd.f32 0.0, %v1523
        %v1525 = vpop.f32.mrb[0].mxu0
        %1526 = vdwg.mxu0
        %1527 = vmatprep.subr.bf16.mxu0 0
        %1528 = vmatpush1.bf16.msra.mxu0 %v1030
        %1529 = vmatprep.subr.bf16.mxu0 0
        %1530 = vmatpush1.bf16.msra.mxu0 %v1031
        %1531 = vmatprep.subr.bf16.mxu0 0
        %1532 = vmatpush1.bf16.msra.mxu0 %v1032
        %1533 = vmatprep.subr.bf16.mxu0 0
        %1534 = vmatpush1.bf16.msra.mxu0 %v1033
        %1535 = vmatprep.subr.bf16.mxu0 0
        %1536 = vmatpush1.bf16.msra.mxu0 %v1034
        %1537 = vmatprep.subr.bf16.mxu0 0
        %1538 = vmatpush1.bf16.msra.mxu0 %v1035
        %1539 = vmatprep.subr.bf16.mxu0 0
        %1540 = vmatpush1.bf16.msra.mxu0 %v1036
        %1541 = vmatprep.subr.bf16.mxu0 0
        %1542 = vmatpush1.bf16.msra.mxu0 %v1037
        %1543 = vmatprep.subr.bf16.mxu0 0
        %1544 = vmatpush1.bf16.msra.mxu0 %v1038
        %1545 = vmatprep.subr.bf16.mxu0 0
        %1546 = vmatpush1.bf16.msra.mxu0 %v1039
        %1547 = vmatprep.subr.bf16.mxu0 0
        %1548 = vmatpush1.bf16.msra.mxu0 %v1040
        %1549 = vmatprep.subr.bf16.mxu0 0
        %1550 = vmatpush1.bf16.msra.mxu0 %v1041
        %1551 = vmatprep.subr.bf16.mxu0 0
        %1552 = vmatpush1.bf16.msra.mxu0 %v1042
        %1553 = vmatprep.subr.bf16.mxu0 0
        %1554 = vmatpush1.bf16.msra.mxu0 %v1043
        %1555 = vmatprep.subr.bf16.mxu0 0
        %1556 = vmatpush1.bf16.msra.mxu0 %v1044
        %1557 = vmatprep.subr.bf16.mxu0 0
        %1558 = vmatpush1.bf16.msra.mxu0 %v1045
        %1559 = vmatprep.mubr.bf16.mxu0 %v1241
        %1560 = vmatmul.mubr.bf16.gmra.mrb[0].mxu0 %v1240
        %v1561 = vpop.f32.mrb[0].mxu0
        %v1562 = vadd.f32 %v1401, %v1561
        %v1563 = vpop.f32.mrb[0].mxu0
        %v1564 = vpop.f32.mrb[0].mxu0
        %v1565 = vadd.f32 %v1404, %v1564
        %v1566 = vpop.f32.mrb[0].mxu0
        %1567 = vmatprep.mubr.bf16.mxu0 %v1245
        %1568 = vmatmul.mubr.bf16.gmra.mrb[0].mxu0 %v1244
        %v1569 = vpop.f32.mrb[0].mxu0
        %v1570 = vadd.f32 %v1409, %v1569
        %v1571 = vpop.f32.mrb[0].mxu0
        %v1572 = vpop.f32.mrb[0].mxu0
        %v1573 = vadd.f32 %v1412, %v1572
        %v1574 = vpop.f32.mrb[0].mxu0
        %1575 = vmatprep.mubr.bf16.mxu0 %v1249
        %1576 = vmatmul.mubr.bf16.gmra.mrb[0].mxu0 %v1248
        %v1577 = vpop.f32.mrb[0].mxu0
        %v1578 = vadd.f32 %v1417, %v1577
        %v1579 = vpop.f32.mrb[0].mxu0
        %v1580 = vpop.f32.mrb[0].mxu0
        %v1581 = vadd.f32 %v1420, %v1580
        %v1582 = vpop.f32.mrb[0].mxu0
        %1583 = vmatprep.mubr.bf16.mxu0 %v1253
        %1584 = vmatmul.mubr.bf16.gmra.mrb[0].mxu0 %v1252
        %v1585 = vpop.f32.mrb[0].mxu0
        %v1586 = vadd.f32 %v1425, %v1585
        %v1587 = vpop.f32.mrb[0].mxu0
        %v1588 = vpop.f32.mrb[0].mxu0
        %v1589 = vadd.f32 %v1428, %v1588
        %v1590 = vpop.f32.mrb[0].mxu0
        %1591 = vmatprep.mubr.bf16.mxu0 %v1257
        %1592 = vmatmul.mubr.bf16.gmra.mrb[0].mxu0 %v1256
        %v1593 = vpop.f32.mrb[0].mxu0
        %v1594 = vadd.f32 %v1433, %v1593
        %v1595 = vpop.f32.mrb[0].mxu0
        %v1596 = vpop.f32.mrb[0].mxu0
        %v1597 = vadd.f32 %v1436, %v1596
        %v1598 = vpop.f32.mrb[0].mxu0
        %1599 = vmatprep.mubr.bf16.mxu0 %v1261
        %1600 = vmatmul.mubr.bf16.gmra.mrb[0].mxu0 %v1260
        %v1601 = vpop.f32.mrb[0].mxu0
        %v1602 = vadd.f32 %v1441, %v1601
        %v1603 = vpop.f32.mrb[0].mxu0
        %v1604 = vpop.f32.mrb[0].mxu0
        %v1605 = vadd.f32 %v1444, %v1604
        %v1606 = vpop.f32.mrb[0].mxu0
        %1607 = vmatprep.mubr.bf16.mxu0 %v1265
        %1608 = vmatmul.mubr.bf16.gmra.mrb[0].mxu0 %v1264
        %v1609 = vpop.f32.mrb[0].mxu0
        %v1610 = vadd.f32 %v1449, %v1609
        %v1611 = vpop.f32.mrb[0].mxu0
        %v1612 = vpop.f32.mrb[0].mxu0
        %v1613 = vadd.f32 %v1452, %v1612
        %v1614 = vpop.f32.mrb[0].mxu0
        %1615 = vmatprep.mubr.bf16.mxu0 %v1269
        %1616 = vmatmul.mubr.bf16.gmra.mrb[0].mxu0 %v1268
        %v1617 = vpop.f32.mrb[0].mxu0
        %v1618 = vadd.f32 %v1457, %v1617
        %v1619 = vpop.f32.mrb[0].mxu0
        %v1620 = vpop.f32.mrb[0].mxu0
        %v1621 = vadd.f32 %v1460, %v1620
        %v1622 = vpop.f32.mrb[0].mxu0
        %1623 = vmatprep.mubr.bf16.mxu0 %v1273
        %1624 = vmatmul.mubr.bf16.gmra.mrb[0].mxu0 %v1272
        %v1625 = vpop.f32.mrb[0].mxu0
        %v1626 = vadd.f32 %v1465, %v1625
        %v1627 = vpop.f32.mrb[0].mxu0
        %v1628 = vpop.f32.mrb[0].mxu0
        %v1629 = vadd.f32 %v1468, %v1628
        %v1630 = vpop.f32.mrb[0].mxu0
        %1631 = vmatprep.mubr.bf16.mxu0 %v1277
        %1632 = vmatmul.mubr.bf16.gmra.mrb[0].mxu0 %v1276
        %v1633 = vpop.f32.mrb[0].mxu0
        %v1634 = vadd.f32 %v1473, %v1633
        %v1635 = vpop.f32.mrb[0].mxu0
        %v1636 = vpop.f32.mrb[0].mxu0
        %v1637 = vadd.f32 %v1476, %v1636
        %v1638 = vpop.f32.mrb[0].mxu0
        %1639 = vmatprep.mubr.bf16.mxu0 %v1281
        %1640 = vmatmul.mubr.bf16.gmra.mrb[0].mxu0 %v1280
        %v1641 = vpop.f32.mrb[0].mxu0
        %v1642 = vadd.f32 %v1481, %v1641
        %v1643 = vpop.f32.mrb[0].mxu0
        %v1644 = vpop.f32.mrb[0].mxu0
        %v1645 = vadd.f32 %v1484, %v1644
        %v1646 = vpop.f32.mrb[0].mxu0
        %1647 = vmatprep.mubr.bf16.mxu0 %v1285
        %1648 = vmatmul.mubr.bf16.gmra.mrb[0].mxu0 %v1284
        %v1649 = vpop.f32.mrb[0].mxu0
        %v1650 = vadd.f32 %v1489, %v1649
        %v1651 = vpop.f32.mrb[0].mxu0
        %v1652 = vpop.f32.mrb[0].mxu0
        %v1653 = vadd.f32 %v1492, %v1652
        %v1654 = vpop.f32.mrb[0].mxu0
        %1655 = vmatprep.mubr.bf16.mxu0 %v1289
        %1656 = vmatmul.mubr.bf16.gmra.mrb[0].mxu0 %v1288
        %v1657 = vpop.f32.mrb[0].mxu0
        %v1658 = vadd.f32 %v1497, %v1657
        %v1659 = vpop.f32.mrb[0].mxu0
        %v1660 = vpop.f32.mrb[0].mxu0
        %v1661 = vadd.f32 %v1500, %v1660
        %v1662 = vpop.f32.mrb[0].mxu0
        %1663 = vmatprep.mubr.bf16.mxu0 %v1293
        %1664 = vmatmul.mubr.bf16.gmra.mrb[0].mxu0 %v1292
        %v1665 = vpop.f32.mrb[0].mxu0
        %v1666 = vadd.f32 %v1505, %v1665
        %v1667 = vpop.f32.mrb[0].mxu0
        %v1668 = vpop.f32.mrb[0].mxu0
        %v1669 = vadd.f32 %v1508, %v1668
        %v1670 = vpop.f32.mrb[0].mxu0
        %1671 = vmatprep.mubr.bf16.mxu0 %v1297
        %1672 = vmatmul.mubr.bf16.gmra.mrb[0].mxu0 %v1296
        %v1673 = vpop.f32.mrb[0].mxu0
        %v1674 = vadd.f32 %v1513, %v1673
        %v1675 = vpop.f32.mrb[0].mxu0
        %v1676 = vpop.f32.mrb[0].mxu0
        %v1677 = vadd.f32 %v1516, %v1676
        %v1678 = vpop.f32.mrb[0].mxu0
        %1679 = vmatprep.mubr.bf16.mxu0 %v1301
        %1680 = vmatmul.mubr.bf16.gmra.mrb[0].mxu0 %v1300
        %v1681 = vpop.f32.mrb[0].mxu0
        %v1682 = vadd.f32 %v1521, %v1681
        %v1683 = vpop.f32.mrb[0].mxu0
        %v1684 = vpop.f32.mrb[0].mxu0
        %v1685 = vadd.f32 %v1524, %v1684
        %v1686 = vpop.f32.mrb[0].mxu0
        %1687 = vdwg.mxu0
        %v1688 = vadd.f32 %v918, %v1562
        %v1689 = vadd.f32 %v919, %v1565
        %v1690 = vadd.f32 %v920, %v1570
        %v1691 = vadd.f32 %v921, %v1573
        %v1692 = vadd.f32 %v922, %v1578
        %v1693 = vadd.f32 %v923, %v1581
        %v1694 = vadd.f32 %v924, %v1586
        %v1695 = vadd.f32 %v925, %v1589
        %v1696 = vadd.f32 %v926, %v1594
        %v1697 = vadd.f32 %v927, %v1597
        %v1698 = vadd.f32 %v928, %v1602
        %v1699 = vadd.f32 %v929, %v1605
        %v1700 = vadd.f32 %v930, %v1610
        %v1701 = vadd.f32 %v931, %v1613
        %v1702 = vadd.f32 %v932, %v1618
        %v1703 = vadd.f32 %v933, %v1621
        %v1704 = vadd.f32 %v934, %v1626
        %v1705 = vadd.f32 %v935, %v1629
        %v1706 = vadd.f32 %v936, %v1634
        %v1707 = vadd.f32 %v937, %v1637
        %v1708 = vadd.f32 %v938, %v1642
        %v1709 = vadd.f32 %v939, %v1645
        %v1710 = vadd.f32 %v940, %v1650
        %v1711 = vadd.f32 %v941, %v1653
        %v1712 = vadd.f32 %v942, %v1658
        %v1713 = vadd.f32 %v943, %v1661
        %v1714 = vadd.f32 %v944, %v1666
        %v1715 = vadd.f32 %v945, %v1669
        %v1716 = vadd.f32 %v946, %v1674
        %v1717 = vadd.f32 %v947, %v1677
        %v1718 = vadd.f32 %v948, %v1682
        %v1719 = vadd.f32 %v949, %v1685
        %1720 = vst [vmem:[#allocation2] sm:$0xff] %v1688
        %1721 = vst [vmem:[#allocation2 + $0x8] sm:$0xff] %v1689
        %1722 = vst [vmem:[#allocation2 + $0x10] sm:$0xff] %v1690
        %1723 = vst [vmem:[#allocation2 + $0x18] sm:$0xff] %v1691
        %1724 = vst [vmem:[#allocation2 + $0x20] sm:$0xff] %v1692
        %1725 = vst [vmem:[#allocation2 + $0x28] sm:$0xff] %v1693
        %1726 = vst [vmem:[#allocation2 + $0x30] sm:$0xff] %v1694
        %1727 = vst [vmem:[#allocation2 + $0x38] sm:$0xff] %v1695
        %1728 = vst [vmem:[#allocation2 + $0x40] sm:$0xff] %v1696
        %1729 = vst [vmem:[#allocation2 + $0x48] sm:$0xff] %v1697
        %1730 = vst [vmem:[#allocation2 + $0x50] sm:$0xff] %v1698
        %1731 = vst [vmem:[#allocation2 + $0x58] sm:$0xff] %v1699
        %1732 = vst [vmem:[#allocation2 + $0x60] sm:$0xff] %v1700
        %1733 = vst [vmem:[#allocation2 + $0x68] sm:$0xff] %v1701
        %1734 = vst [vmem:[#allocation2 + $0x70] sm:$0xff] %v1702
        %1735 = vst [vmem:[#allocation2 + $0x78] sm:$0xff] %v1703
        %1736 = vst [vmem:[#allocation2 + $0x80] sm:$0xff] %v1704
        %1737 = vst [vmem:[#allocation2 + $0x88] sm:$0xff] %v1705
        %1738 = vst [vmem:[#allocation2 + $0x90] sm:$0xff] %v1706
        %1739 = vst [vmem:[#allocation2 + $0x98] sm:$0xff] %v1707
        %1740 = vst [vmem:[#allocation2 + $0xa0] sm:$0xff] %v1708
        %1741 = vst [vmem:[#allocation2 + $0xa8] sm:$0xff] %v1709
        %1742 = vst [vmem:[#allocation2 + $0xb0] sm:$0xff] %v1710
        %1743 = vst [vmem:[#allocation2 + $0xb8] sm:$0xff] %v1711
        %1744 = vst [vmem:[#allocation2 + $0xc0] sm:$0xff] %v1712
        %1745 = vst [vmem:[#allocation2 + $0xc8] sm:$0xff] %v1713
        %1746 = vst [vmem:[#allocation2 + $0xd0] sm:$0xff] %v1714
        %1747 = vst [vmem:[#allocation2 + $0xd8] sm:$0xff] %v1715
        %1748 = vst [vmem:[#allocation2 + $0xe0] sm:$0xff] %v1716
        %1749 = vst [vmem:[#allocation2 + $0xe8] sm:$0xff] %v1717
        %1750 = vst [vmem:[#allocation2 + $0xf0] sm:$0xff] %v1718
        %1751 = vst [vmem:[#allocation2 + $0xf8] sm:$0xff] %v1719
        // Predicated region
        $region53: #{tpu_custom_call.1} parent=35 // pred_check
          %p1752 = pneg %p273
        $region54: #{tpu_custom_call.1} parent=35 // pred_check_branch
          %1754 = sbr.rel (%p1752) target = $region56
        $region55: #{tpu_custom_call.1} parent=35 // pred_region
          %v1755 = vld [vmem:[#allocation2] sm:$0xff]
          %v1756 = vld [vmem:[#allocation2 + $0x8] sm:$0xff]
          %v1757 = vld [vmem:[#allocation2 + $0x10] sm:$0xff]
          %v1758 = vld [vmem:[#allocation2 + $0x18] sm:$0xff]
          %v1759 = vld [vmem:[#allocation2 + $0x20] sm:$0xff]
          %v1760 = vld [vmem:[#allocation2 + $0x28] sm:$0xff]
          %v1761 = vld [vmem:[#allocation2 + $0x30] sm:$0xff]
          %v1762 = vld [vmem:[#allocation2 + $0x38] sm:$0xff]
          %v1763 = vld [vmem:[#allocation2 + $0x40] sm:$0xff]
          %v1764 = vld [vmem:[#allocation2 + $0x48] sm:$0xff]
          %v1765 = vld [vmem:[#allocation2 + $0x50] sm:$0xff]
          %v1766 = vld [vmem:[#allocation2 + $0x58] sm:$0xff]
          %v1767 = vld [vmem:[#allocation2 + $0x60] sm:$0xff]
          %v1768 = vld [vmem:[#allocation2 + $0x68] sm:$0xff]
          %v1769 = vld [vmem:[#allocation2 + $0x70] sm:$0xff]
          %v1770 = vld [vmem:[#allocation2 + $0x78] sm:$0xff]
          %v1771 = vld [vmem:[#allocation2 + $0x80] sm:$0xff]
          %v1772 = vld [vmem:[#allocation2 + $0x88] sm:$0xff]
          %v1773 = vld [vmem:[#allocation2 + $0x90] sm:$0xff]
          %v1774 = vld [vmem:[#allocation2 + $0x98] sm:$0xff]
          %v1775 = vld [vmem:[#allocation2 + $0xa0] sm:$0xff]
          %v1776 = vld [vmem:[#allocation2 + $0xa8] sm:$0xff]
          %v1777 = vld [vmem:[#allocation2 + $0xb0] sm:$0xff]
          %v1778 = vld [vmem:[#allocation2 + $0xb8] sm:$0xff]
          %v1779 = vld [vmem:[#allocation2 + $0xc0] sm:$0xff]
          %v1780 = vld [vmem:[#allocation2 + $0xc8] sm:$0xff]
          %v1781 = vld [vmem:[#allocation2 + $0xd0] sm:$0xff]
          %v1782 = vld [vmem:[#allocation2 + $0xd8] sm:$0xff]
          %v1783 = vld [vmem:[#allocation2 + $0xe0] sm:$0xff]
          %v1784 = vld [vmem:[#allocation2 + $0xe8] sm:$0xff]
          %v1785 = vld [vmem:[#allocation2 + $0xf0] sm:$0xff]
          %v1786 = vld [vmem:[#allocation2 + $0xf8] sm:$0xff]
          %v1787 = vld [vmem:[%s3] sm:$0x1]
          %v1789 = vlaneseq
          %v1790 = vshrl.u32 %v1789, 7
          %v1791 = vsub.s32 0, %v1790
          %v1792 = vrot.slane %v1787, %v1791
          %v1794 = vadd.f32 %v1755, %v1792
          %v1795 = vadd.f32 %v1756, %v1792
          %v1796 = vadd.f32 %v1757, %v1792
          %v1797 = vadd.f32 %v1758, %v1792
          %v1798 = vadd.f32 %v1759, %v1792
          %v1799 = vadd.f32 %v1760, %v1792
          %v1800 = vadd.f32 %v1761, %v1792
          %v1801 = vadd.f32 %v1762, %v1792
          %v1802 = vadd.f32 %v1763, %v1792
          %v1803 = vadd.f32 %v1764, %v1792
          %v1804 = vadd.f32 %v1765, %v1792
          %v1805 = vadd.f32 %v1766, %v1792
          %v1806 = vadd.f32 %v1767, %v1792
          %v1807 = vadd.f32 %v1768, %v1792
          %v1808 = vadd.f32 %v1769, %v1792
          %v1809 = vadd.f32 %v1770, %v1792
          %v1810 = vadd.f32 %v1771, %v1792
          %v1811 = vadd.f32 %v1772, %v1792
          %v1812 = vadd.f32 %v1773, %v1792
          %v1813 = vadd.f32 %v1774, %v1792
          %v1814 = vadd.f32 %v1775, %v1792
          %v1815 = vadd.f32 %v1776, %v1792
          %v1816 = vadd.f32 %v1777, %v1792
          %v1817 = vadd.f32 %v1778, %v1792
          %v1818 = vadd.f32 %v1779, %v1792
          %v1819 = vadd.f32 %v1780, %v1792
          %v1820 = vadd.f32 %v1781, %v1792
          %v1821 = vadd.f32 %v1782, %v1792
          %v1822 = vadd.f32 %v1783, %v1792
          %v1823 = vadd.f32 %v1784, %v1792
          %v1824 = vadd.f32 %v1785, %v1792
          %v1825 = vadd.f32 %v1786, %v1792
          %1826 = vst [vmem:[%s267] sm:$0xff] %v1794
          %1827 = vst [vmem:[%s267 + $0x8] sm:$0xff] %v1795
          %1828 = vst [vmem:[%s267 + $0x10] sm:$0xff] %v1796
          %1829 = vst [vmem:[%s267 + $0x18] sm:$0xff] %v1797
          %1830 = vst [vmem:[%s267 + $0x20] sm:$0xff] %v1798
          %1831 = vst [vmem:[%s267 + $0x28] sm:$0xff] %v1799
          %1832 = vst [vmem:[%s267 + $0x30] sm:$0xff] %v1800
          %1833 = vst [vmem:[%s267 + $0x38] sm:$0xff] %v1801
          %1834 = vst [vmem:[%s267 + $0x40] sm:$0xff] %v1802
          %1835 = vst [vmem:[%s267 + $0x48] sm:$0xff] %v1803
          %1836 = vst [vmem:[%s267 + $0x50] sm:$0xff] %v1804
          %1837 = vst [vmem:[%s267 + $0x58] sm:$0xff] %v1805
          %1838 = vst [vmem:[%s267 + $0x60] sm:$0xff] %v1806
          %1839 = vst [vmem:[%s267 + $0x68] sm:$0xff] %v1807
          %1840 = vst [vmem:[%s267 + $0x70] sm:$0xff] %v1808
          %1841 = vst [vmem:[%s267 + $0x78] sm:$0xff] %v1809
          %1842 = vst [vmem:[%s267 + $0x80] sm:$0xff] %v1810
          %1843 = vst [vmem:[%s267 + $0x88] sm:$0xff] %v1811
          %1844 = vst [vmem:[%s267 + $0x90] sm:$0xff] %v1812
          %1845 = vst [vmem:[%s267 + $0x98] sm:$0xff] %v1813
          %1846 = vst [vmem:[%s267 + $0xa0] sm:$0xff] %v1814
          %1847 = vst [vmem:[%s267 + $0xa8] sm:$0xff] %v1815
          %1848 = vst [vmem:[%s267 + $0xb0] sm:$0xff] %v1816
          %1849 = vst [vmem:[%s267 + $0xb8] sm:$0xff] %v1817
          %1850 = vst [vmem:[%s267 + $0xc0] sm:$0xff] %v1818
          %1851 = vst [vmem:[%s267 + $0xc8] sm:$0xff] %v1819
          %1852 = vst [vmem:[%s267 + $0xd0] sm:$0xff] %v1820
          %1853 = vst [vmem:[%s267 + $0xd8] sm:$0xff] %v1821
          %1854 = vst [vmem:[%s267 + $0xe0] sm:$0xff] %v1822
          %1855 = vst [vmem:[%s267 + $0xe8] sm:$0xff] %v1823
          %1856 = vst [vmem:[%s267 + $0xf0] sm:$0xff] %v1824
          %1857 = vst [vmem:[%s267 + $0xf8] sm:$0xff] %v1825
        $region56: #{tpu_custom_call.1} parent=35 // pred_fallthru
          _
        %s1858 = sand.u32 %s136, 1
        %s1859 = scalar_lea.sflag [#allocation5], %s1858
        %s1860 = sand.u32 %s136, 1
        %s1861 = smul.addr %s1860, 256
        %s1862 = scalar_lea.vmem [#allocation9], %s1861
        // Predicated region
        $region57: #{tpu_custom_call.1} parent=35 // pred_check
          %p1863 = pneg %p146
        $region58: #{tpu_custom_call.1} parent=35 // pred_check_branch
          %1865 = sbr.rel (%p1863) target = $region60
        $region59: #{tpu_custom_call.1} parent=35 // pred_region
          %s1866 = smul.u32 32, %s24
          %s1868 = ssub.s32 4096, 4096
          %1869 = vsyncadd %s1859, %s1868
          %s1870 = smul.addr %s1866, 128
          %s1871 = scalar_lea.hbm %s4, %s1870
          %s1872 = sshll.u32 %s1862, 4
          %s1873 = int_to_ptr.vmem [resolvable:$true] %s1872
          %1878 = dma.vmem_to_hbm [thread:$0]  %s1873, 4096, %s1871, %s1859, 128, 128, 8
        $region60: #{tpu_custom_call.1} parent=35 // pred_fallthru
          _
      $region36: #{tpu_custom_call.1} parent=5 // pred_fallthru
        _
      %p1879 = scmp.le.s32.totalorder 2, %s15
      // Predicated region
      $region61: #{tpu_custom_call.1} parent=5 // pred_check
        %p1880 = pneg %p1879
      $region62: #{tpu_custom_call.1} parent=5 // pred_check_branch
        %1882 = sbr.rel (%p1880) target = $region64
      $region63: #{tpu_custom_call.1} parent=5 // pred_region
        %s1883 = ssub.s32 %s15, 2
        // Predicated region
        $region65: #{tpu_custom_call.1} parent=63 // pred_check
          %p1884 = pneg %p152
        $region66: #{tpu_custom_call.1} parent=63 // pred_check_branch
          %1886 = sbr.rel (%p1884) target = $region68
        $region67: #{tpu_custom_call.1} parent=63 // pred_region
          %s1887 = sand.u32 %s137, 1
          %s1888 = scalar_lea.sflag [#allocation5], %s1887
          %s1889 = sand.u32 %s137, 1
          %s1890 = smul.addr %s1889, 256
          %s1891 = scalar_lea.vmem [#allocation9], %s1890
          %1892 = dma.done %s1888, 4096
        $region68: #{tpu_custom_call.1} parent=63 // pred_fallthru
          _
      $region64: #{tpu_custom_call.1} parent=5 // pred_fallthru
        _
    $region6: #{tpu_custom_call.1} parent=1 // loop_footer
      %s19 = sadd.s32 1, %s15
    $region7: #{tpu_custom_call.1} parent=1 // loop_footer_branch
      %14 = sbr.rel target = $region3
    $region8: #{tpu_custom_call.1} parent=1 // loop_exit
      _
    %1893 = vsyncpa [#allocation4], 1
    %s1894 = scalar_lea.sflag [#allocation4], 1
    %1895 = vsyncpa %s1894, 1
    %1896 = vsyncpa [#allocation7], 1
    %1897 = vsyncpa [#allocation5], 1
    %s1898 = scalar_lea.sflag [#allocation5], 1
    %1899 = vsyncpa %s1898, 1

</llo_original>
